<compile_context>
chip_gen: v7x
topology: tpu7x:2x2x1
jax: 0.10.0
libtpu: 0.0.40
codegen_flags: <defaults>
</compile_context>

<pallas_src>
import math

import jax
import jax.numpy as jnp
from jax.experimental import pallas as pl
from jax.experimental.pallas import tpu as pltpu


# ---------------------------------------------------------------------------
# Kernels
# ---------------------------------------------------------------------------
def _node_kernel(x_ref, m_ref, w_ref, b_ref, o_ref):
    # x_ref: (TM, H)    f32 rows of flattened x
    # m_ref: (TM, 5)    per-row mask value for each of the 5 masked linears
    # w_ref: (5H, TN)   vstack([W_s.T, W_r.T, W_o.T, W_a.T, W_v.T]) column tile
    # b_ref: (1, TN)    sum of the 5 biases (f32)
    # o_ref: (TM, TN)
    x = x_ref[...]
    m = m_ref[...]
    h = x.shape[-1]
    acc = jnp.zeros(o_ref.shape, jnp.float32)
    for k in range(5):
        # Mask multiply in f32 (v5e VPU has no bf16), cast only for the MXU.
        xk = (x * m[:, k:k + 1]).astype(w_ref.dtype)
        acc = acc + jnp.dot(xk, w_ref[k * h:(k + 1) * h, :],
                            preferred_element_type=jnp.float32)
    o_ref[...] = (acc + b_ref[...]).astype(o_ref.dtype)


def _linear_kernel(x_ref, w_ref, b_ref, o_ref):
    # x_ref: (TM, H); w_ref: (H, TN) = W.T tile; b_ref: (1, TN); o_ref: (TM, TN)
    acc = jnp.dot(x_ref[...].astype(w_ref.dtype), w_ref[...],
                  preferred_element_type=jnp.float32)
    o_ref[...] = (acc + b_ref[...]).astype(o_ref.dtype)


def _weight_spec(shape, index_map, single_buffer):
    # Constant-index operands: single buffer (no benefit from double buffering,
    # halves resident-weight VMEM).  Fall back to a plain spec if unsupported.
    if single_buffer:
        return pl.BlockSpec(shape, index_map, pipeline_mode=pl.Buffered(1))
    return pl.BlockSpec(shape, index_map)


# ---------------------------------------------------------------------------
# Module wrapper (parameter setup + pallas_call glue)
# ---------------------------------------------------------------------------
class PrepareForMultiHeadAttention:
    ROW_TILE = 512  # rows of the flattened (B*S, H) per grid step

    def __init__(self, hidden_dim: int, heads: int, bias: bool, use_node: bool,
                 key, weight_dtype=jnp.bfloat16):
        assert hidden_dim % heads == 0, "hidden_dim must be divisible by heads"
        self.hidden_dim = hidden_dim
        self.heads = heads
        self.use_node = use_node
        self.bias = bias
        self.weight_dtype = jnp.dtype(weight_dtype)
        self._mask_cache = {}
        self._single_buffer_weights = True
        bound = 1.0 / math.sqrt(hidden_dim)  # torch nn.Linear default init range

        def make_linear(k, with_bias=True):
            kw, kb = jax.random.split(k)
            w = jax.random.uniform(kw, (hidden_dim, hidden_dim), jnp.float32, -bound, bound)
            b = (jax.random.uniform(kb, (hidden_dim,), jnp.float32, -bound, bound)
                 if with_bias else jnp.zeros((hidden_dim,), jnp.float32))
            return w, b

        if use_node:
            keys = jax.random.split(key, 5)
            self.params = [make_linear(k) for k in keys]  # [(W, b)] x 5 (s, r, o, a, v)
            # Prepared ONCE: stacked transposed weights (5H, H) in compute dtype,
            # pre-summed bias kept in f32 for accurate accumulation.
            self.w_cat = jnp.concatenate([w.T for (w, _) in self.params], axis=0
                                         ).astype(self.weight_dtype)          # (5H, H)
            self.b_sum = sum(b for (_, b) in self.params)[None, :]            # (1, H) f32
        else:
            self.params = make_linear(key, with_bias=bias)
            w, b = self.params
            self.w_t = w.T.astype(self.weight_dtype)   # (H, H)
            self.b_row = b[None, :]                    # (1, H) f32

    # ---- masks exactly as in the torch forward (requires odd S >= 3) -------
    @staticmethod
    def _build_masks(seq_len: int):
        m_s = jnp.array([1] + [0] * (seq_len - 1), jnp.float32)
        m_r = jnp.array([0, 1] + [0] * (seq_len - 2), jnp.float32)
        m_o = jnp.array([0, 0, 1] + [0] * (seq_len - 3), jnp.float32)
        m_a = jnp.array([0, 0, 0] + [1, 0] * int((seq_len - 3) / 2), jnp.float32)
        m_v = jnp.array([0, 0, 0] + [0, 1] * int((seq_len - 3) / 2), jnp.float32)
        return jnp.stack([m_s, m_r, m_o, m_a, m_v])  # (5, S)

    def _row_mask(self, b, s, m_pad):
        key = (b, s)
        if key not in self._mask_cache:
            assert s >= 3 and (s - 3) % 2 == 0, "node masks require odd seq_len >= 3"
            masks = self._build_masks(s)                     # (5, S)
            rm = jnp.tile(masks.T, (b, 1))                   # (B*S, 5)
            if m_pad != b * s:
                rm = jnp.pad(rm, ((0, m_pad - b * s), (0, 0)))
            self._mask_cache[key] = rm
        return self._mask_cache[key]

    # ---- tiling helpers -----------------------------------------------------
    @classmethod
    def _row_tile(cls, m):
        m8 = -(-m // 8) * 8                 # round rows up to 8 sublanes
        if m8 <= 8:
            return 8
        # Aim for >= 2 grid steps (v7x: 2 TensorCores), cap at ROW_TILE,
        # keep a multiple of 8.
        tm = min(cls.ROW_TILE, -(-m8 // 2))
        return -(-tm // 8) * 8

    @staticmethod
    def _col_tile(h):
        # Small H: keep the full width resident (exempt from the 128 rule as a
        # full-dim block).  Large H: stream (.., tn) weight tiles, tn matched
        # to the 256-wide MXU where possible.
        if h <= 512 or h % 128 != 0:
            return h
        return 256 if h % 256 == 0 else 128

    def _vmem_limit(self, tm, tn):
        h = self.hidden_dim
        wb = self.weight_dtype.itemsize
        k_rows = 5 * h if self.use_node else h
        est = (2 * tm * h * 4            # x tile, double buffered
               + 2 * tm * 128 * 4        # mask tile (lane padded), double buffered
               + k_rows * tn * wb        # weight tile, single buffered
               + 128 * 4                 # bias
               + 2 * tm * tn * 4         # out tile, double buffered
               + tm * tn * 4             # f32 accumulator temporary
               + tm * max(h, tn) * wb)   # cast temporaries
        return int(min(64 * 2 ** 20, max(32 * 2 ** 20, 2 * est)))

    # ---- pallas_call dispatch -----------------------------------------------
    def _forward(self, xf, row_mask, tm, tn, m_pad, single_buffer):
        h = self.hidden_dim
        wb = self.weight_dtype.itemsize
        grid = (m_pad // tm, pl.cdiv(h, tn))
        row_spec = pl.BlockSpec((tm, h), lambda i, j: (i, 0))
        out_spec = pl.BlockSpec((tm, tn), lambda i, j: (i, j))
        cparams = pltpu.CompilerParams(
            dimension_semantics=("parallel", "parallel"),
            vmem_limit_bytes=self._vmem_limit(tm, tn),
        )

        if self.use_node:
            cost = pl.CostEstimate(
                flops=2 * m_pad * (5 * h) * h,
                transcendentals=0,
                bytes_accessed=(2 * m_pad * h * 4 + m_pad * 5 * 4
                                + 5 * h * h * wb + h * 4),
            )
            return pl.pallas_call(
                _node_kernel,
                out_shape=jax.ShapeDtypeStruct((m_pad, h), xf.dtype),
                grid_spec=pltpu.PrefetchScalarGridSpec(
                    num_scalar_prefetch=0,
                    grid=grid,
                    in_specs=[
                        row_spec,
                        pl.BlockSpec((tm, 5), lambda i, j: (i, 0)),
                        _weight_spec((5 * h, tn), lambda i, j: (0, j), single_buffer),
                        _weight_spec((1, tn), lambda i, j: (0, j), single_buffer),
                    ],
                    out_specs=out_spec,
                ),
                compiler_params=cparams,
                cost_estimate=cost,
            )(xf, row_mask, self.w_cat, self.b_sum)

        cost = pl.CostEstimate(
            flops=2 * m_pad * h * h,
            transcendentals=0,
            bytes_accessed=(2 * m_pad * h * 4 + h * h * wb + h * 4),
        )
        return pl.pallas_call(
            _linear_kernel,
            out_shape=jax.ShapeDtypeStruct((m_pad, h), xf.dtype),
            grid_spec=pltpu.PrefetchScalarGridSpec(
                num_scalar_prefetch=0,
                grid=grid,
                in_specs=[
                    row_spec,
                    _weight_spec((h, tn), lambda i, j: (0, j), single_buffer),
                    _weight_spec((1, tn), lambda i, j: (0, j), single_buffer),
                ],
                out_specs=out_spec,
            ),
            compiler_params=cparams,
            cost_estimate=cost,
        )(xf, self.w_t, self.b_row)

    # ---- public forward ------------------------------------------------------
    def __call__(self, x):
        B, S, H = x.shape
        assert H == self.hidden_dim
        M = B * S
        tm = self._row_tile(M)
        tn = self._col_tile(H)
        m_pad = -(-M // tm) * tm

        xf = x.reshape(M, H)
        if m_pad != M:
            xf = jnp.pad(xf, ((0, m_pad - M), (0, 0)))  # dense last block, no masked stores

        row_mask = self._row_mask(B, S, m_pad) if self.use_node else None

        try:
            out = self._forward(xf, row_mask, tm, tn, m_pad,
                                single_buffer=self._single_buffer_weights)
        except Exception:
            if not self._single_buffer_weights:
                raise
            # pipeline_mode=pl.Buffered(1) unsupported on this jax build ->
            # retry once with default (double) buffering.
            self._single_buffer_weights = False
            out = self._forward(xf, row_mask, tm, tn, m_pad, single_buffer=False)

        if m_pad != M:
            out = out[:M]
        return out.reshape(B, S, self.heads, H // self.heads)

    # Pure-JAX fp32 reference (mirrors the torch forward) for correctness check.
    def reference(self, x):
        B, S, H = x.shape
        if self.use_node:
            masks = self._build_masks(S)
            out = jnp.zeros((B, S, H), jnp.float32)
            for k, (w, b) in enumerate(self.params):
                out = out + (x * masks[k][None, :, None]) @ w.T + b
        else:
            w, b = self.params
            out = x @ w.T + b
        return out.reshape(B, S, self.heads, H // self.heads)


# ---------------------------------------------------------------------------
if __name__ == "__main__":
    key = jax.random.PRNGKey(0)
    k_x, k_node, k_lin = jax.random.split(key, 3)

    B, S, H, heads = 2, 9, 32, 4  # S odd so the torch mask construction is valid
    x = jax.random.normal(k_x, (B, S, H), jnp.float32)

    # use_node = True, bf16 weights (default fast path)
    mod_node = PrepareForMultiHeadAttention(H, heads, bias=True, use_node=True, key=k_node)
    y_node = jax.block_until_ready(mod_node(x))
    assert y_node.shape == (B, S, heads, H // heads)
    assert jnp.allclose(y_node, mod_node.reference(x), atol=3e-2, rtol=3e-2)

    # use_node = True, fp32 weights (tight check against the torch-style reference)
    mod_node32 = PrepareForMultiHeadAttention(H, heads, bias=True, use_node=True,
                                              key=k_node, weight_dtype=jnp.float32)
    y_node32 = jax.block_until_ready(mod_node32(x))
    assert jnp.allclose(y_node32, mod_node32.reference(x), atol=1e-4, rtol=1e-4)

    # use_node = False (plain linear), bf16 weights
    mod_lin = PrepareForMultiHeadAttention(H, heads, bias=True, use_node=False, key=k_lin)
    y_lin = jax.block_until_ready(mod_lin(x))
    assert y_lin.shape == (B, S, heads, H // heads)
    assert jnp.allclose(y_lin, mod_lin.reference(x), atol=3e-2, rtol=3e-2)

    print("KERNEL_OK")
</pallas_src>

<mosaic_0001>
module attributes {stable_mosaic.version = 11 : i64} {
  func.func @_node_kernel(%arg0: i32, %arg1: i32, %arg2: memref<16x32xf32, #tpu.memory_space<vmem>>, %arg3: memref<16x5xf32, #tpu.memory_space<vmem>>, %arg4: memref<160x32xbf16, #tpu.memory_space<vmem>>, %arg5: memref<1x32xf32, #tpu.memory_space<vmem>>, %arg6: memref<16x32xf32, #tpu.memory_space<vmem>>) attributes {dimension_semantics = [#tpu.dimension_semantics<parallel>, #tpu.dimension_semantics<parallel>], iteration_bounds = array<i64: 2, 1>, scalar_prefetch = 0 : i64, scratch_operands = 0 : i64, tpu.core_type = #tpu.core_type<tc>, window_params = [{transform_indices = @transform_0, window_bounds = array<i64: 16, 32>}, {transform_indices = @transform_1, window_bounds = array<i64: 16, 5>}, {pipeline_mode = #tpu.pipeline_mode<synchronous>, transform_indices = @transform_2, window_bounds = array<i64: 160, 32>}, {pipeline_mode = #tpu.pipeline_mode<synchronous>, transform_indices = @transform_3, window_bounds = array<i64: 1, 32>}, {transform_indices = @transform_4, window_bounds = array<i64: 16, 32>}]} {
    %c0 = arith.constant 0 : index
    %c0_0 = arith.constant 0 : index
    %0 = vector.load %arg2[%c0, %c0_0] : memref<16x32xf32, #tpu.memory_space<vmem>>, vector<16x32xf32>
    %c0_1 = arith.constant 0 : index
    %c0_2 = arith.constant 0 : index
    %1 = vector.load %arg3[%c0_1, %c0_2] : memref<16x5xf32, #tpu.memory_space<vmem>>, vector<16x5xf32>
    %cst = arith.constant 0.000000e+00 : f32
    %2 = vector.broadcast %cst : f32 to vector<16x32xf32>
    %3 = vector.extract_strided_slice %1 {offsets = [0, 0], sizes = [16, 1], strides = [1, 1]} : vector<16x5xf32> to vector<16x1xf32>
    %4 = vector.broadcast %3 : vector<16x1xf32> to vector<16x32xf32>
    %5 = arith.mulf %0, %4 : vector<16x32xf32>
    %6 = arith.truncf %5 : vector<16x32xf32> to vector<16x32xbf16>
    %c0_3 = arith.constant 0 : index
    %c0_4 = arith.constant 0 : index
    %7 = vector.load %arg4[%c0_3, %c0_4] : memref<160x32xbf16, #tpu.memory_space<vmem>>, vector<32x32xbf16>
    %cst_5 = arith.constant dense<0.000000e+00> : vector<16x32xf32>
    %8 = tpu.matmul %6, %7, %cst_5 {dimension_numbers = #tpu.dot_dimension_numbers<[1], [0], [0], [1], [0, 0, 1, 1], [], []>} : vector<16x32xbf16>, vector<32x32xbf16>, vector<16x32xf32> -> vector<16x32xf32>
    %9 = arith.addf %2, %8 : vector<16x32xf32>
    %10 = vector.extract_strided_slice %1 {offsets = [0, 1], sizes = [16, 1], strides = [1, 1]} : vector<16x5xf32> to vector<16x1xf32>
    %11 = vector.broadcast %10 : vector<16x1xf32> to vector<16x32xf32>
    %12 = arith.mulf %0, %11 : vector<16x32xf32>
    %13 = arith.truncf %12 : vector<16x32xf32> to vector<16x32xbf16>
    %c32 = arith.constant 32 : index
    %c0_6 = arith.constant 0 : index
    %14 = vector.load %arg4[%c32, %c0_6] : memref<160x32xbf16, #tpu.memory_space<vmem>>, vector<32x32xbf16>
    %cst_7 = arith.constant dense<0.000000e+00> : vector<16x32xf32>
    %15 = tpu.matmul %13, %14, %cst_7 {dimension_numbers = #tpu.dot_dimension_numbers<[1], [0], [0], [1], [0, 0, 1, 1], [], []>} : vector<16x32xbf16>, vector<32x32xbf16>, vector<16x32xf32> -> vector<16x32xf32>
    %16 = arith.addf %9, %15 : vector<16x32xf32>
    %17 = vector.extract_strided_slice %1 {offsets = [0, 2], sizes = [16, 1], strides = [1, 1]} : vector<16x5xf32> to vector<16x1xf32>
    %18 = vector.broadcast %17 : vector<16x1xf32> to vector<16x32xf32>
    %19 = arith.mulf %0, %18 : vector<16x32xf32>
    %20 = arith.truncf %19 : vector<16x32xf32> to vector<16x32xbf16>
    %c64 = arith.constant 64 : index
    %c0_8 = arith.constant 0 : index
    %21 = vector.load %arg4[%c64, %c0_8] : memref<160x32xbf16, #tpu.memory_space<vmem>>, vector<32x32xbf16>
    %cst_9 = arith.constant dense<0.000000e+00> : vector<16x32xf32>
    %22 = tpu.matmul %20, %21, %cst_9 {dimension_numbers = #tpu.dot_dimension_numbers<[1], [0], [0], [1], [0, 0, 1, 1], [], []>} : vector<16x32xbf16>, vector<32x32xbf16>, vector<16x32xf32> -> vector<16x32xf32>
    %23 = arith.addf %16, %22 : vector<16x32xf32>
    %24 = vector.extract_strided_slice %1 {offsets = [0, 3], sizes = [16, 1], strides = [1, 1]} : vector<16x5xf32> to vector<16x1xf32>
    %25 = vector.broadcast %24 : vector<16x1xf32> to vector<16x32xf32>
    %26 = arith.mulf %0, %25 : vector<16x32xf32>
    %27 = arith.truncf %26 : vector<16x32xf32> to vector<16x32xbf16>
    %c96 = arith.constant 96 : index
    %c0_10 = arith.constant 0 : index
    %28 = vector.load %arg4[%c96, %c0_10] : memref<160x32xbf16, #tpu.memory_space<vmem>>, vector<32x32xbf16>
    %cst_11 = arith.constant dense<0.000000e+00> : vector<16x32xf32>
    %29 = tpu.matmul %27, %28, %cst_11 {dimension_numbers = #tpu.dot_dimension_numbers<[1], [0], [0], [1], [0, 0, 1, 1], [], []>} : vector<16x32xbf16>, vector<32x32xbf16>, vector<16x32xf32> -> vector<16x32xf32>
    %30 = arith.addf %23, %29 : vector<16x32xf32>
    %31 = vector.extract_strided_slice %1 {offsets = [0, 4], sizes = [16, 1], strides = [1, 1]} : vector<16x5xf32> to vector<16x1xf32>
    %32 = vector.broadcast %31 : vector<16x1xf32> to vector<16x32xf32>
    %33 = arith.mulf %0, %32 : vector<16x32xf32>
    %34 = arith.truncf %33 : vector<16x32xf32> to vector<16x32xbf16>
    %c128 = arith.constant 128 : index
    %c0_12 = arith.constant 0 : index
    %35 = vector.load %arg4[%c128, %c0_12] : memref<160x32xbf16, #tpu.memory_space<vmem>>, vector<32x32xbf16>
    %cst_13 = arith.constant dense<0.000000e+00> : vector<16x32xf32>
    %36 = tpu.matmul %34, %35, %cst_13 {dimension_numbers = #tpu.dot_dimension_numbers<[1], [0], [0], [1], [0, 0, 1, 1], [], []>} : vector<16x32xbf16>, vector<32x32xbf16>, vector<16x32xf32> -> vector<16x32xf32>
    %37 = arith.addf %30, %36 : vector<16x32xf32>
    %c0_14 = arith.constant 0 : index
    %c0_15 = arith.constant 0 : index
    %38 = vector.load %arg5[%c0_14, %c0_15] : memref<1x32xf32, #tpu.memory_space<vmem>>, vector<1x32xf32>
    %39 = vector.broadcast %38 : vector<1x32xf32> to vector<16x32xf32>
    %40 = arith.addf %37, %39 : vector<16x32xf32>
    %c0_16 = arith.constant 0 : index
    %c0_17 = arith.constant 0 : index
    %41 = vector.load %arg6[%c0_16, %c0_17] : memref<16x32xf32, #tpu.memory_space<vmem>>, vector<16x32xf32>
    tpu.vector_store %arg6[%c0_16, %c0_17], %40 {strides = array<i32>} : memref<16x32xf32, #tpu.memory_space<vmem>>, vector<16x32xf32>,
    return
  }
  func.func @transform_0(%arg0: i32, %arg1: i32) -> (i32, i32) {
    %c0_i32 = arith.constant 0 : i32
    %c0_i32_0 = arith.constant 0 : i32
    return %arg0, %c0_i32 : i32, i32
  }
  func.func @transform_1(%arg0: i32, %arg1: i32) -> (i32, i32) {
    %c0_i32 = arith.constant 0 : i32
    %c0_i32_0 = arith.constant 0 : i32
    return %arg0, %c0_i32 : i32, i32
  }
  func.func @transform_2(%arg0: i32, %arg1: i32) -> (i32, i32) {
    %c0_i32 = arith.constant 0 : i32
    %c0_i32_0 = arith.constant 0 : i32
    return %c0_i32, %arg1 : i32, i32
  }
  func.func @transform_3(%arg0: i32, %arg1: i32) -> (i32, i32) {
    %c0_i32 = arith.constant 0 : i32
    %c0_i32_0 = arith.constant 0 : i32
    return %c0_i32, %arg1 : i32, i32
  }
  func.func @transform_4(%arg0: i32, %arg1: i32) -> (i32, i32) {
    %c0_i32 = arith.constant 0 : i32
    return %arg0, %arg1 : i32, i32
  }
}

module attributes {stable_mosaic.version = 11 : i64} {
  func.func @_node_kernel(%arg0: i32, %arg1: i32, %arg2: memref<16x32xf32, #tpu.memory_space<vmem>>, %arg3: memref<16x5xf32, #tpu.memory_space<vmem>>, %arg4: memref<160x32xbf16, #tpu.memory_space<vmem>>, %arg5: memref<1x32xf32, #tpu.memory_space<vmem>>, %arg6: memref<16x32xf32, #tpu.memory_space<vmem>>) attributes {dimension_semantics = [#tpu.dimension_semantics<parallel>, #tpu.dimension_semantics<parallel>], iteration_bounds = array<i64: 2, 1>, scalar_prefetch = 0 : i64, scratch_operands = 0 : i64, tpu.core_type = #tpu.core_type<tc>, window_params = [{transform_indices = @transform_0, window_bounds = array<i64: 16, 32>}, {transform_indices = @transform_1, window_bounds = array<i64: 16, 5>}, {transform_indices = @transform_2, window_bounds = array<i64: 160, 32>}, {transform_indices = @transform_3, window_bounds = array<i64: 1, 32>}, {transform_indices = @transform_4, window_bounds = array<i64: 16, 32>}]} {
    %c0 = arith.constant 0 : index
    %c0_0 = arith.constant 0 : index
    %0 = vector.load %arg2[%c0, %c0_0] : memref<16x32xf32, #tpu.memory_space<vmem>>, vector<16x32xf32>
    %c0_1 = arith.constant 0 : index
    %c0_2 = arith.constant 0 : index
    %1 = vector.load %arg3[%c0_1, %c0_2] : memref<16x5xf32, #tpu.memory_space<vmem>>, vector<16x5xf32>
    %cst = arith.constant 0.000000e+00 : f32
    %2 = vector.broadcast %cst : f32 to vector<16x32xf32>
    %3 = vector.extract_strided_slice %1 {offsets = [0, 0], sizes = [16, 1], strides = [1, 1]} : vector<16x5xf32> to vector<16x1xf32>
    %4 = vector.broadcast %3 : vector<16x1xf32> to vector<16x32xf32>
    %5 = arith.mulf %0, %4 : vector<16x32xf32>
    %6 = arith.truncf %5 : vector<16x32xf32> to vector<16x32xbf16>
    %c0_3 = arith.constant 0 : index
    %c0_4 = arith.constant 0 : index
    %7 = vector.load %arg4[%c0_3, %c0_4] : memref<160x32xbf16, #tpu.memory_space<vmem>>, vector<32x32xbf16>
    %cst_5 = arith.constant dense<0.000000e+00> : vector<16x32xf32>
    %8 = tpu.matmul %6, %7, %cst_5 {dimension_numbers = #tpu.dot_dimension_numbers<[1], [0], [0], [1], [0, 0, 1, 1], [], []>} : vector<16x32xbf16>, vector<32x32xbf16>, vector<16x32xf32> -> vector<16x32xf32>
    %9 = arith.addf %2, %8 : vector<16x32xf32>
    %10 = vector.extract_strided_slice %1 {offsets = [0, 1], sizes = [16, 1], strides = [1, 1]} : vector<16x5xf32> to vector<16x1xf32>
    %11 = vector.broadcast %10 : vector<16x1xf32> to vector<16x32xf32>
    %12 = arith.mulf %0, %11 : vector<16x32xf32>
    %13 = arith.truncf %12 : vector<16x32xf32> to vector<16x32xbf16>
    %c32 = arith.constant 32 : index
    %c0_6 = arith.constant 0 : index
    %14 = vector.load %arg4[%c32, %c0_6] : memref<160x32xbf16, #tpu.memory_space<vmem>>, vector<32x32xbf16>
    %cst_7 = arith.constant dense<0.000000e+00> : vector<16x32xf32>
    %15 = tpu.matmul %13, %14, %cst_7 {dimension_numbers = #tpu.dot_dimension_numbers<[1], [0], [0], [1], [0, 0, 1, 1], [], []>} : vector<16x32xbf16>, vector<32x32xbf16>, vector<16x32xf32> -> vector<16x32xf32>
    %16 = arith.addf %9, %15 : vector<16x32xf32>
    %17 = vector.extract_strided_slice %1 {offsets = [0, 2], sizes = [16, 1], strides = [1, 1]} : vector<16x5xf32> to vector<16x1xf32>
    %18 = vector.broadcast %17 : vector<16x1xf32> to vector<16x32xf32>
    %19 = arith.mulf %0, %18 : vector<16x32xf32>
    %20 = arith.truncf %19 : vector<16x32xf32> to vector<16x32xbf16>
    %c64 = arith.constant 64 : index
    %c0_8 = arith.constant 0 : index
    %21 = vector.load %arg4[%c64, %c0_8] : memref<160x32xbf16, #tpu.memory_space<vmem>>, vector<32x32xbf16>
    %cst_9 = arith.constant dense<0.000000e+00> : vector<16x32xf32>
    %22 = tpu.matmul %20, %21, %cst_9 {dimension_numbers = #tpu.dot_dimension_numbers<[1], [0], [0], [1], [0, 0, 1, 1], [], []>} : vector<16x32xbf16>, vector<32x32xbf16>, vector<16x32xf32> -> vector<16x32xf32>
    %23 = arith.addf %16, %22 : vector<16x32xf32>
    %24 = vector.extract_strided_slice %1 {offsets = [0, 3], sizes = [16, 1], strides = [1, 1]} : vector<16x5xf32> to vector<16x1xf32>
    %25 = vector.broadcast %24 : vector<16x1xf32> to vector<16x32xf32>
    %26 = arith.mulf %0, %25 : vector<16x32xf32>
    %27 = arith.truncf %26 : vector<16x32xf32> to vector<16x32xbf16>
    %c96 = arith.constant 96 : index
    %c0_10 = arith.constant 0 : index
    %28 = vector.load %arg4[%c96, %c0_10] : memref<160x32xbf16, #tpu.memory_space<vmem>>, vector<32x32xbf16>
    %cst_11 = arith.constant dense<0.000000e+00> : vector<16x32xf32>
    %29 = tpu.matmul %27, %28, %cst_11 {dimension_numbers = #tpu.dot_dimension_numbers<[1], [0], [0], [1], [0, 0, 1, 1], [], []>} : vector<16x32xbf16>, vector<32x32xbf16>, vector<16x32xf32> -> vector<16x32xf32>
    %30 = arith.addf %23, %29 : vector<16x32xf32>
    %31 = vector.extract_strided_slice %1 {offsets = [0, 4], sizes = [16, 1], strides = [1, 1]} : vector<16x5xf32> to vector<16x1xf32>
    %32 = vector.broadcast %31 : vector<16x1xf32> to vector<16x32xf32>
    %33 = arith.mulf %0, %32 : vector<16x32xf32>
    %34 = arith.truncf %33 : vector<16x32xf32> to vector<16x32xbf16>
    %c128 = arith.constant 128 : index
    %c0_12 = arith.constant 0 : index
    %35 = vector.load %arg4[%c128, %c0_12] : memref<160x32xbf16, #tpu.memory_space<vmem>>, vector<32x32xbf16>
    %cst_13 = arith.constant dense<0.000000e+00> : vector<16x32xf32>
    %36 = tpu.matmul %34, %35, %cst_13 {dimension_numbers = #tpu.dot_dimension_numbers<[1], [0], [0], [1], [0, 0, 1, 1], [], []>} : vector<16x32xbf16>, vector<32x32xbf16>, vector<16x32xf32> -> vector<16x32xf32>
    %37 = arith.addf %30, %36 : vector<16x32xf32>
    %c0_14 = arith.constant 0 : index
    %c0_15 = arith.constant 0 : index
    %38 = vector.load %arg5[%c0_14, %c0_15] : memref<1x32xf32, #tpu.memory_space<vmem>>, vector<1x32xf32>
    %39 = vector.broadcast %38 : vector<1x32xf32> to vector<16x32xf32>
    %40 = arith.addf %37, %39 : vector<16x32xf32>
    %c0_16 = arith.constant 0 : index
    %c0_17 = arith.constant 0 : index
    %41 = vector.load %arg6[%c0_16, %c0_17] : memref<16x32xf32, #tpu.memory_space<vmem>>, vector<16x32xf32>
    tpu.vector_store %arg6[%c0_16, %c0_17], %40 {strides = array<i32>} : memref<16x32xf32, #tpu.memory_space<vmem>>, vector<16x32xf32>,
    return
  }
  func.func @transform_0(%arg0: i32, %arg1: i32) -> (i32, i32) {
    %c0_i32 = arith.constant 0 : i32
    %c0_i32_0 = arith.constant 0 : i32
    return %arg0, %c0_i32 : i32, i32
  }
  func.func @transform_1(%arg0: i32, %arg1: i32) -> (i32, i32) {
    %c0_i32 = arith.constant 0 : i32
    %c0_i32_0 = arith.constant 0 : i32
    return %arg0, %c0_i32 : i32, i32
  }
  func.func @transform_2(%arg0: i32, %arg1: i32) -> (i32, i32) {
    %c0_i32 = arith.constant 0 : i32
    %c0_i32_0 = arith.constant 0 : i32
    return %c0_i32, %arg1 : i32, i32
  }
  func.func @transform_3(%arg0: i32, %arg1: i32) -> (i32, i32) {
    %c0_i32 = arith.constant 0 : i32
    %c0_i32_0 = arith.constant 0 : i32
    return %c0_i32, %arg1 : i32, i32
  }
  func.func @transform_4(%arg0: i32, %arg1: i32) -> (i32, i32) {
    %c0_i32 = arith.constant 0 : i32
    return %arg0, %arg1 : i32, i32
  }
}

</mosaic_0001>

<llo_original>
// kernel: tpu_custom_call.1
$region0: #{tpu_custom_call.1}
  #allocation0 [shape = 'u32[]', space=smem, size = 0x4, offset = 0x4, fixed_abs, tag = 'smem constant byte address 0x4 - core index']
  #allocation1 [shape = 'u32[144,128]{1,0:T(1,128)}', space=vmem, size = 0x12000, scoped, tag = 'internal scratch']
  %s0 = inlined_call_operand.vmem [shape: f32[32,32], index: 0, kind: input, shape index: {}]
  %s1 = inlined_call_operand.vmem [shape: f32[32,5], index: 1, kind: input, shape index: {}]
  %s2 = inlined_call_operand.vmem [shape: bf16[160,32], index: 2, kind: input, shape index: {}]
  %s3 = inlined_call_operand.vmem [shape: f32[1,32], index: 3, kind: input, shape index: {}]
  %s4 = inlined_call_operand.hbm [shape: f32[32,32], index: 4, kind: output, shape index: {}]
  %s5 = sld [smem:[#allocation0]]
  $region49: #{tpu_custom_call.1} parent=0
    _
  %s7 = ssub.s32 1, %s5
  %s8 = scalar_select 0, %s7, %s5
  $region1: #{tpu_custom_call.1} parent=0
    #allocation2 [shape = 'u8[16384]{0}', space=vmem, size = 0x4000, scoped, tag = 'output window, operand 0']
    #allocation3 [shape = 's32[2]{0}', space=sflag, size = 0x8, scoped, tag = 'scoped memory for tpu_custom_call.1']
    %9 = vsyncpa [#allocation3], 0
    %s10 = scalar_lea.sflag [#allocation3], 1
    %11 = vsyncpa %s10, 0
    loop: start=0, step=1, limit=4
    $region2: #{tpu_custom_call.1} parent=1 // loop_pre_header
      _
    $region3: #{tpu_custom_call.1} parent=1 // loop_header
      %s13 = sphi 0, %s17
      %p14 = scmp.ge.s32.totalorder %s13, 4
      %s20 = sphi 0, %s32
      %s21 = sphi 0, %s28
      %s22 = sphi 0, %s20
      %s23 = sphi 0, %s21
      %s24 = sphi 0, %s22
      %s25 = sphi 0, %s23
      %s35 = sphi 0, %s37
      %s38 = sphi 0, %s35
      %s39 = sphi 0, %s38
      %s55 = sphi 0, %s39
      %s61 = sphi 0, %s63
      %s64 = sphi 0, %s61
      %s65 = sphi 0, %s64
      %s81 = sphi 0, %s65
      %s87 = sphi 0, %s89
      %s90 = sphi 0, %s87
      %s91 = sphi 0, %s90
      %s107 = sphi 0, %s91
      %s113 = sphi 0, %s115
      %s116 = sphi 0, %s113
      %s117 = sphi 0, %s116
      %s133 = sphi 0, %s117
      %s141 = sphi 0, %s143
      %s144 = sphi 0, %s141
      %s145 = sphi 0, %s144
      %s161 = sphi 0, %s145
    $region4: #{tpu_custom_call.1} parent=1 // loop_header_branch
      %16 = sbr.rel (%p14) target = $region8
    $region5: #{tpu_custom_call.1} parent=1 // loop_body
      %s18 = ssub.s32 %s13, 1
      %s19 = ssub.s32 %s13, 2
      %s26 = sadd.s32 1, %s21
      %p27 = scmp.ge.s32.totalorder %s26, 1
      %s28 = scalar_select %p27, 0, %s26
      %s29 = sadd.s32 1, %s20
      %s30 = scalar_select %p27, %s29, %s20
      %p31 = scmp.ge.s32.totalorder %s30, 2
      %s32 = scalar_select %p31, 0, %s30
      %s33 = ssub.s32 %s20, %s32
      %p34 = scmp.eq.s32.totalorder %s33, 0
      %s36 = sadd.s32 %s35, 1
      %s37 = scalar_select %p34, %s35, %s36
      %p40 = pneg %p34
      %p41 = scmp.eq.s32.totalorder %s13, 1
      %p42 = por %p40, %p41
      %p43 = scmp.ne.s32.totalorder %s35, %s38
      %p44 = scmp.eq.s32.totalorder %s13, 0
      %p45 = por %p43, %p44
      %p46 = scmp.ne.s32.totalorder %s35, %s38
      %p47 = scmp.eq.s32.totalorder %s18, 1
      %p48 = por %p46, %p47
      %p49 = scmp.ne.s32.totalorder %s38, %s39
      %p50 = scmp.eq.s32.totalorder %s18, 0
      %p51 = por %p49, %p50
      %p52 = scmp.ne.s32.totalorder %s38, %s39
      %p53 = scmp.eq.s32.totalorder %s19, 1
      %p54 = por %p52, %p53
      %p56 = scmp.ne.s32.totalorder %s39, %s55
      %p57 = scmp.eq.s32.totalorder %s19, 0
      %p58 = por %p56, %p57
      %s59 = ssub.s32 %s20, %s32
      %p60 = scmp.eq.s32.totalorder %s59, 0
      %s62 = sadd.s32 %s61, 1
      %s63 = scalar_select %p60, %s61, %s62
      %p66 = pneg %p60
      %p67 = scmp.eq.s32.totalorder %s13, 1
      %p68 = por %p66, %p67
      %p69 = scmp.ne.s32.totalorder %s61, %s64
      %p70 = scmp.eq.s32.totalorder %s13, 0
      %p71 = por %p69, %p70
      %p72 = scmp.ne.s32.totalorder %s61, %s64
      %p73 = scmp.eq.s32.totalorder %s18, 1
      %p74 = por %p72, %p73
      %p75 = scmp.ne.s32.totalorder %s64, %s65
      %p76 = scmp.eq.s32.totalorder %s18, 0
      %p77 = por %p75, %p76
      %p78 = scmp.ne.s32.totalorder %s64, %s65
      %p79 = scmp.eq.s32.totalorder %s19, 1
      %p80 = por %p78, %p79
      %p82 = scmp.ne.s32.totalorder %s65, %s81
      %p83 = scmp.eq.s32.totalorder %s19, 0
      %p84 = por %p82, %p83
      %s85 = ssub.s32 %s21, %s28
      %p86 = scmp.eq.s32.totalorder %s85, 0
      %s88 = sadd.s32 %s87, 1
      %s89 = scalar_select %p86, %s87, %s88
      %p92 = pneg %p86
      %p93 = scmp.eq.s32.totalorder %s13, 1
      %p94 = por %p92, %p93
      %p95 = scmp.ne.s32.totalorder %s87, %s90
      %p96 = scmp.eq.s32.totalorder %s13, 0
      %p97 = por %p95, %p96
      %p98 = scmp.ne.s32.totalorder %s87, %s90
      %p99 = scmp.eq.s32.totalorder %s18, 1
      %p100 = por %p98, %p99
      %p101 = scmp.ne.s32.totalorder %s90, %s91
      %p102 = scmp.eq.s32.totalorder %s18, 0
      %p103 = por %p101, %p102
      %p104 = scmp.ne.s32.totalorder %s90, %s91
      %p105 = scmp.eq.s32.totalorder %s19, 1
      %p106 = por %p104, %p105
      %p108 = scmp.ne.s32.totalorder %s91, %s107
      %p109 = scmp.eq.s32.totalorder %s19, 0
      %p110 = por %p108, %p109
      %s111 = ssub.s32 %s21, %s28
      %p112 = scmp.eq.s32.totalorder %s111, 0
      %s114 = sadd.s32 %s113, 1
      %s115 = scalar_select %p112, %s113, %s114
      %p118 = pneg %p112
      %p119 = scmp.eq.s32.totalorder %s13, 1
      %p120 = por %p118, %p119
      %p121 = scmp.ne.s32.totalorder %s113, %s116
      %p122 = scmp.eq.s32.totalorder %s13, 0
      %p123 = por %p121, %p122
      %p124 = scmp.ne.s32.totalorder %s113, %s116
      %p125 = scmp.eq.s32.totalorder %s18, 1
      %p126 = por %p124, %p125
      %p127 = scmp.ne.s32.totalorder %s116, %s117
      %p128 = scmp.eq.s32.totalorder %s18, 0
      %p129 = por %p127, %p128
      %p130 = scmp.ne.s32.totalorder %s116, %s117
      %p131 = scmp.eq.s32.totalorder %s19, 1
      %p132 = por %p130, %p131
      %p134 = scmp.ne.s32.totalorder %s117, %s133
      %p135 = scmp.eq.s32.totalorder %s19, 0
      %p136 = por %p134, %p135
      %s137 = ssub.s32 %s20, %s32
      %s138 = ssub.s32 %s21, %s28
      %s139 = sor.u32 %s137, %s138
      %p140 = scmp.eq.s32.totalorder %s139, 0
      %s142 = sadd.s32 %s141, 1
      %s143 = scalar_select %p140, %s141, %s142
      %p146 = pneg %p140
      %p147 = scmp.eq.s32.totalorder %s13, 1
      %p148 = por %p146, %p147
      %p149 = scmp.ne.s32.totalorder %s141, %s144
      %p150 = scmp.eq.s32.totalorder %s13, 0
      %p151 = por %p149, %p150
      %p152 = scmp.ne.s32.totalorder %s141, %s144
      %p153 = scmp.eq.s32.totalorder %s18, 1
      %p154 = por %p152, %p153
      %p155 = scmp.ne.s32.totalorder %s144, %s145
      %p156 = scmp.eq.s32.totalorder %s18, 0
      %p157 = por %p155, %p156
      %p158 = scmp.ne.s32.totalorder %s144, %s145
      %p159 = scmp.eq.s32.totalorder %s19, 1
      %p160 = por %p158, %p159
      %p162 = scmp.ne.s32.totalorder %s145, %s161
      %p163 = scmp.eq.s32.totalorder %s19, 0
      %p164 = por %p162, %p163
      %p165 = scmp.le.s32.totalorder 1, %s13
      %p166 = scmp.lt.s32.totalorder %s13, 3
      %p167 = pnand %p165, %p166
      %p168 = pneg %p167
      // Predicated region
      $region9: #{tpu_custom_call.1} parent=5 // pred_check
        _
      $region10: #{tpu_custom_call.1} parent=5 // pred_check_branch
        %170 = sbr.rel (%p167) target = $region12
      $region11: #{tpu_custom_call.1} parent=5 // pred_region
        %s171 = ssub.s32 %s13, 1
        // Predicated region
        $region13: #{tpu_custom_call.1} parent=11 // pred_check
          %p172 = pneg %p103
        $region14: #{tpu_custom_call.1} parent=11 // pred_check_branch
          %174 = sbr.rel (%p172) target = $region16
        $region15: #{tpu_custom_call.1} parent=11 // pred_region
          %p175 = scmp.lt.s32.totalorder %s23, 0
          %s176 = scalar_select %p175, %s23, 0
          %s177 = smul.addr %s176, 4
          %s178 = scalar_lea.vmem %s2, %s177
        $region16: #{tpu_custom_call.1} parent=11 // pred_fallthru
          _
        // Predicated region
        $region17: #{tpu_custom_call.1} parent=11 // pred_check
          %p179 = pneg %p129
        $region18: #{tpu_custom_call.1} parent=11 // pred_check_branch
          %181 = sbr.rel (%p179) target = $region20
        $region19: #{tpu_custom_call.1} parent=11 // pred_region
          %p182 = scmp.lt.s32.totalorder %s23, 0
          %s183 = scalar_select %p182, %s23, 0
          %s184 = scalar_lea.vmem %s3, %s183
        $region20: #{tpu_custom_call.1} parent=11 // pred_fallthru
          _
      $region12: #{tpu_custom_call.1} parent=5 // pred_fallthru
        _
      %p185 = scmp.lt.s32.totalorder %s13, 2
      // Predicated region
      $region21: #{tpu_custom_call.1} parent=5 // pred_check
        %p186 = pneg %p185
      $region22: #{tpu_custom_call.1} parent=5 // pred_check_branch
        %188 = sbr.rel (%p186) target = $region24
      $region23: #{tpu_custom_call.1} parent=5 // pred_region
        // Predicated region
        $region25: #{tpu_custom_call.1} parent=23 // pred_check
          %p189 = pneg %p45
        $region26: #{tpu_custom_call.1} parent=23 // pred_check_branch
          %191 = sbr.rel (%p189) target = $region28
        $region27: #{tpu_custom_call.1} parent=23 // pred_region
          %s192 = smul.u32 2, %s20
          %p193 = scmp.lt.s32.totalorder %s192, 3
          %s194 = scalar_select %p193, %s192, 3
          %s195 = smul.addr %s194, 8
          %s196 = scalar_lea.vmem %s0, %s195
          %s197 = smul.u32 2, %s20
        $region28: #{tpu_custom_call.1} parent=23 // pred_fallthru
          _
        // Predicated region
        $region29: #{tpu_custom_call.1} parent=23 // pred_check
          %p198 = pneg %p71
        $region30: #{tpu_custom_call.1} parent=23 // pred_check_branch
          %200 = sbr.rel (%p198) target = $region32
        $region31: #{tpu_custom_call.1} parent=23 // pred_region
          %s201 = smul.u32 2, %s20
          %p202 = scmp.lt.s32.totalorder %s201, 3
          %s203 = scalar_select %p202, %s201, 3
          %s204 = smul.addr %s203, 8
          %s205 = scalar_lea.vmem %s1, %s204
          %s206 = smul.u32 2, %s20
        $region32: #{tpu_custom_call.1} parent=23 // pred_fallthru
          _
      $region24: #{tpu_custom_call.1} parent=5 // pred_fallthru
        _
      %p207 = scmp.le.s32.totalorder 1, %s13
      %p208 = scmp.lt.s32.totalorder %s13, 3
      %p209 = pnand %p207, %p208
      %p210 = pneg %p209
      // Predicated region
      $region33: #{tpu_custom_call.1} parent=5 // pred_check
        _
      $region34: #{tpu_custom_call.1} parent=5 // pred_check_branch
        %212 = sbr.rel (%p209) target = $region36
      $region35: #{tpu_custom_call.1} parent=5 // pred_region
        %s213 = ssub.s32 %s13, 1
        %s214 = smul.u32 2, %s22
        %p215 = scmp.lt.s32.totalorder %s214, 3
        %s216 = scalar_select %p215, %s214, 3
        %s217 = smul.addr %s216, 8
        %s218 = scalar_lea.vmem %s0, %s217
        %p219 = pneg %p51
        %p220 = pneg %p48
        %s221 = smul.u32 2, %s22
        %p222 = scmp.lt.s32.totalorder %s221, 3
        %s223 = scalar_select %p222, %s221, 3
        %s224 = smul.addr %s223, 8
        %s225 = scalar_lea.vmem %s1, %s224
        %p226 = pneg %p77
        %p227 = pneg %p74
        %p228 = scmp.lt.s32.totalorder %s23, 0
        %s229 = scalar_select %p228, %s23, 0
        %s230 = smul.addr %s229, 4
        %s231 = scalar_lea.vmem %s2, %s230
        %p232 = pneg %p103
        %p233 = pneg %p100
        %p234 = scmp.lt.s32.totalorder %s23, 0
        %s235 = scalar_select %p234, %s23, 0
        %s236 = scalar_lea.vmem %s3, %s235
        %p237 = pneg %p129
        %p238 = pneg %p126
        %p239 = pneg %p157
        %p240 = pneg %p154
        %s241 = sand.u32 %s144, 1
        %s242 = scalar_lea.sflag [#allocation3], %s241
        %s243 = sand.u32 %s144, 1
        %s244 = smul.addr %s243, 16
        %s245 = scalar_lea.vmem [#allocation2], %s244
        %s246 = smul.u32 2, %s22
        %p247 = scmp.lt.s32.totalorder %s246, 3
        %s248 = scalar_select %p247, %s246, 3
        %s249 = smul.addr %s248, 8
        %s250 = scalar_lea.vmem %s0, %s249
        %s251 = smul.u32 2, %s22
        %s252 = smul.u32 2, %s22
        %p253 = scmp.lt.s32.totalorder %s252, 3
        %s254 = scalar_select %p253, %s252, 3
        %s255 = smul.addr %s254, 8
        %s256 = scalar_lea.vmem %s1, %s255
        %s257 = smul.u32 2, %s22
        %p258 = scmp.lt.s32.totalorder %s23, 0
        %s259 = scalar_select %p258, %s23, 0
        %s260 = smul.addr %s259, 4
        %s261 = scalar_lea.vmem %s2, %s260
        %p262 = scmp.lt.s32.totalorder %s23, 0
        %s263 = scalar_select %p262, %s23, 0
        %s264 = scalar_lea.vmem %s3, %s263
        %s265 = smul.u32 2, %s22
        %v267 = vld [vmem:[%s250] sm:$0xff]
        %v268 = vld [vmem:[%s250 + $0x8] sm:$0xff]
        %v269 = vld [vmem:[%s256] sm:$0xff]
        %v270 = vld [vmem:[%s256 + $0x8] sm:$0xff]
        %272 = vset.pattern.permute.xlu0 0
        %273 = vperm.xlu0 %272, %v269
        %v274 = vpop.permute.xlu0 %273
        %277 = vset.pattern.permute.xlu0 0
        %278 = vperm.xlu0 %277, %v270
        %v279 = vpop.permute.xlu0 %278
        %v281 = vmul.f32 %v267, %v274
        %v282 = vmul.f32 %v268, %v279
        %v283 = vpack.c.bf16 %v282, %v281
        %v284 = vld [vmem:[%s261] sm:$0xf]
        %v285 = vld [vmem:[%s261 + $0x4] sm:$0xf]
        %v286 = vld [vmem:[%s261 + $0x8] sm:$0xf]
        %v287 = vld [vmem:[%s261 + $0xc] sm:$0xf]
        %288 = vset.pattern.permute.xlu0 1
        %289 = vperm.xlu0 %288, %v269
        %v290 = vpop.permute.xlu0 %289
        %292 = vset.pattern.permute.xlu0 1
        %293 = vperm.xlu0 %292, %v270
        %v294 = vpop.permute.xlu0 %293
        %v296 = vmul.f32 %v267, %v290
        %v297 = vmul.f32 %v268, %v294
        %v298 = vpack.c.bf16 %v297, %v296
        %v299 = vld [vmem:[%s261 + $0x10] sm:$0xf]
        %v300 = vld [vmem:[%s261 + $0x14] sm:$0xf]
        %v301 = vld [vmem:[%s261 + $0x18] sm:$0xf]
        %v302 = vld [vmem:[%s261 + $0x1c] sm:$0xf]
        %v307 = vunpack.c.l.b16 %v299
        %v308 = vunpack.c.l.b16 %v300
        %v309 = vunpack.c.l.b16 %v301
        %v310 = vunpack.c.l.b16 %v302
        %v311 = vpack.c.b16 %v308, %v307
        %v312 = vpack.c.b16 %v310, %v309
        %vm315 = vcmask 261120
        %v317 = vsel %vm315, %v298, 0
        %319 = vmatprep.subr.bf16.mxu0 0
        %320 = vmatpush1.bf16.msra.mxu0 %v311
        %321 = vmatprep.subr.bf16.mxu0 0
        %322 = vmatpush1.bf16.msra.mxu0 %v312
        %323 = vmatprep.subr.bf16.mxu0 0
        %324 = vmatpush1.bf16.msra.mxu0 0
        %325 = vmatprep.subr.bf16.mxu0 0
        %326 = vmatpush1.bf16.msra.mxu0 0
        %327 = vmatprep.subr.bf16.mxu0 0
        %328 = vmatpush1.bf16.msra.mxu0 0
        %329 = vmatprep.subr.bf16.mxu0 0
        %330 = vmatpush1.bf16.msra.mxu0 0
        %331 = vmatprep.subr.bf16.mxu0 0
        %332 = vmatpush1.bf16.msra.mxu0 0
        %333 = vmatprep.subr.bf16.mxu0 0
        %334 = vmatpush1.bf16.msra.mxu0 0
        %335 = vmatprep.subr.bf16.mxu0 0
        %336 = vmatpush1.bf16.msra.mxu0 0
        %337 = vmatprep.subr.bf16.mxu0 0
        %338 = vmatpush1.bf16.msra.mxu0 0
        %339 = vmatprep.subr.bf16.mxu0 0
        %340 = vmatpush1.bf16.msra.mxu0 0
        %341 = vmatprep.subr.bf16.mxu0 0
        %342 = vmatpush1.bf16.msra.mxu0 0
        %343 = vmatprep.subr.bf16.mxu0 0
        %344 = vmatpush1.bf16.msra.mxu0 0
        %345 = vmatprep.subr.bf16.mxu0 0
        %346 = vmatpush1.bf16.msra.mxu0 0
        %347 = vmatprep.subr.bf16.mxu0 0
        %348 = vmatpush1.bf16.msra.mxu0 0
        %349 = vmatprep.subr.bf16.mxu0 0
        %350 = vmatpush1.bf16.msra.mxu0 0
        %351 = vmatprep.mubr.bf16.mxu0 0
        %352 = vmatmul.mubr.bf16.gmra.mrb[0].mxu0 %v317
        %v353 = vpop.f32.mrb[0].mxu0
        %v354 = vadd.f32 0.0, %v353
        %v355 = vpop.f32.mrb[0].mxu0
        %v356 = vpop.f32.mrb[0].mxu0
        %v357 = vadd.f32 0.0, %v356
        %v358 = vpop.f32.mrb[0].mxu0
        %359 = vdwg.mxu0
        %v364 = vunpack.c.l.b16 %v284
        %v365 = vunpack.c.l.b16 %v285
        %v366 = vunpack.c.l.b16 %v286
        %v367 = vunpack.c.l.b16 %v287
        %v368 = vpack.c.b16 %v365, %v364
        %v369 = vpack.c.b16 %v367, %v366
        %v373 = vsel %vm315, %v283, 0
        %375 = vmatprep.subr.bf16.mxu0 0
        %376 = vmatpush1.bf16.msra.mxu0 %v368
        %377 = vmatprep.subr.bf16.mxu0 0
        %378 = vmatpush1.bf16.msra.mxu0 %v369
        %379 = vmatprep.subr.bf16.mxu0 0
        %380 = vmatpush1.bf16.msra.mxu0 0
        %381 = vmatprep.subr.bf16.mxu0 0
        %382 = vmatpush1.bf16.msra.mxu0 0
        %383 = vmatprep.subr.bf16.mxu0 0
        %384 = vmatpush1.bf16.msra.mxu0 0
        %385 = vmatprep.subr.bf16.mxu0 0
        %386 = vmatpush1.bf16.msra.mxu0 0
        %387 = vmatprep.subr.bf16.mxu0 0
        %388 = vmatpush1.bf16.msra.mxu0 0
        %389 = vmatprep.subr.bf16.mxu0 0
        %390 = vmatpush1.bf16.msra.mxu0 0
        %391 = vmatprep.subr.bf16.mxu0 0
        %392 = vmatpush1.bf16.msra.mxu0 0
        %393 = vmatprep.subr.bf16.mxu0 0
        %394 = vmatpush1.bf16.msra.mxu0 0
        %395 = vmatprep.subr.bf16.mxu0 0
        %396 = vmatpush1.bf16.msra.mxu0 0
        %397 = vmatprep.subr.bf16.mxu0 0
        %398 = vmatpush1.bf16.msra.mxu0 0
        %399 = vmatprep.subr.bf16.mxu0 0
        %400 = vmatpush1.bf16.msra.mxu0 0
        %401 = vmatprep.subr.bf16.mxu0 0
        %402 = vmatpush1.bf16.msra.mxu0 0
        %403 = vmatprep.subr.bf16.mxu0 0
        %404 = vmatpush1.bf16.msra.mxu0 0
        %405 = vmatprep.subr.bf16.mxu0 0
        %406 = vmatpush1.bf16.msra.mxu0 0
        %407 = vmatprep.mubr.bf16.mxu0 0
        %408 = vmatmul.mubr.bf16.gmra.mrb[0].mxu0 %v373
        %v409 = vpop.f32.mrb[0].mxu0
        %v410 = vadd.f32 %v354, %v409
        %v411 = vpop.f32.mrb[0].mxu0
        %v412 = vpop.f32.mrb[0].mxu0
        %v413 = vadd.f32 %v357, %v412
        %v414 = vpop.f32.mrb[0].mxu0
        %415 = vdwg.mxu0
        %416 = vset.pattern.permute.xlu0 2
        %417 = vperm.xlu0 %416, %v269
        %v418 = vpop.permute.xlu0 %417
        %420 = vset.pattern.permute.xlu0 2
        %421 = vperm.xlu0 %420, %v270
        %v422 = vpop.permute.xlu0 %421
        %v424 = vmul.f32 %v267, %v418
        %v425 = vmul.f32 %v268, %v422
        %v426 = vpack.c.bf16 %v425, %v424
        %v427 = vld [vmem:[%s261 + $0x20] sm:$0xf]
        %v428 = vld [vmem:[%s261 + $0x24] sm:$0xf]
        %v429 = vld [vmem:[%s261 + $0x28] sm:$0xf]
        %v430 = vld [vmem:[%s261 + $0x2c] sm:$0xf]
        %v435 = vunpack.c.l.b16 %v427
        %v436 = vunpack.c.l.b16 %v428
        %v437 = vunpack.c.l.b16 %v429
        %v438 = vunpack.c.l.b16 %v430
        %v439 = vpack.c.b16 %v436, %v435
        %v440 = vpack.c.b16 %v438, %v437
        %v444 = vsel %vm315, %v426, 0
        %446 = vmatprep.subr.bf16.mxu0 0
        %447 = vmatpush1.bf16.msra.mxu0 %v439
        %448 = vmatprep.subr.bf16.mxu0 0
        %449 = vmatpush1.bf16.msra.mxu0 %v440
        %450 = vmatprep.subr.bf16.mxu0 0
        %451 = vmatpush1.bf16.msra.mxu0 0
        %452 = vmatprep.subr.bf16.mxu0 0
        %453 = vmatpush1.bf16.msra.mxu0 0
        %454 = vmatprep.subr.bf16.mxu0 0
        %455 = vmatpush1.bf16.msra.mxu0 0
        %456 = vmatprep.subr.bf16.mxu0 0
        %457 = vmatpush1.bf16.msra.mxu0 0
        %458 = vmatprep.subr.bf16.mxu0 0
        %459 = vmatpush1.bf16.msra.mxu0 0
        %460 = vmatprep.subr.bf16.mxu0 0
        %461 = vmatpush1.bf16.msra.mxu0 0
        %462 = vmatprep.subr.bf16.mxu0 0
        %463 = vmatpush1.bf16.msra.mxu0 0
        %464 = vmatprep.subr.bf16.mxu0 0
        %465 = vmatpush1.bf16.msra.mxu0 0
        %466 = vmatprep.subr.bf16.mxu0 0
        %467 = vmatpush1.bf16.msra.mxu0 0
        %468 = vmatprep.subr.bf16.mxu0 0
        %469 = vmatpush1.bf16.msra.mxu0 0
        %470 = vmatprep.subr.bf16.mxu0 0
        %471 = vmatpush1.bf16.msra.mxu0 0
        %472 = vmatprep.subr.bf16.mxu0 0
        %473 = vmatpush1.bf16.msra.mxu0 0
        %474 = vmatprep.subr.bf16.mxu0 0
        %475 = vmatpush1.bf16.msra.mxu0 0
        %476 = vmatprep.subr.bf16.mxu0 0
        %477 = vmatpush1.bf16.msra.mxu0 0
        %478 = vmatprep.mubr.bf16.mxu0 0
        %479 = vmatmul.mubr.bf16.gmra.mrb[0].mxu0 %v444
        %v480 = vpop.f32.mrb[0].mxu0
        %v481 = vadd.f32 0.0, %v480
        %v482 = vpop.f32.mrb[0].mxu0
        %v483 = vpop.f32.mrb[0].mxu0
        %v484 = vadd.f32 0.0, %v483
        %v485 = vpop.f32.mrb[0].mxu0
        %486 = vdwg.mxu0
        %v487 = vadd.f32 %v410, %v481
        %v488 = vadd.f32 %v413, %v484
        %489 = vset.pattern.permute.xlu0 3
        %490 = vperm.xlu0 %489, %v269
        %v491 = vpop.permute.xlu0 %490
        %493 = vset.pattern.permute.xlu0 3
        %494 = vperm.xlu0 %493, %v270
        %v495 = vpop.permute.xlu0 %494
        %v497 = vmul.f32 %v267, %v491
        %v498 = vmul.f32 %v268, %v495
        %v499 = vpack.c.bf16 %v498, %v497
        %v500 = vld [vmem:[%s261 + $0x30] sm:$0xf]
        %v501 = vld [vmem:[%s261 + $0x34] sm:$0xf]
        %v502 = vld [vmem:[%s261 + $0x38] sm:$0xf]
        %v503 = vld [vmem:[%s261 + $0x3c] sm:$0xf]
        %v508 = vunpack.c.l.b16 %v500
        %v509 = vunpack.c.l.b16 %v501
        %v510 = vunpack.c.l.b16 %v502
        %v511 = vunpack.c.l.b16 %v503
        %v512 = vpack.c.b16 %v509, %v508
        %v513 = vpack.c.b16 %v511, %v510
        %v517 = vsel %vm315, %v499, 0
        %519 = vmatprep.subr.bf16.mxu0 0
        %520 = vmatpush1.bf16.msra.mxu0 %v512
        %521 = vmatprep.subr.bf16.mxu0 0
        %522 = vmatpush1.bf16.msra.mxu0 %v513
        %523 = vmatprep.subr.bf16.mxu0 0
        %524 = vmatpush1.bf16.msra.mxu0 0
        %525 = vmatprep.subr.bf16.mxu0 0
        %526 = vmatpush1.bf16.msra.mxu0 0
        %527 = vmatprep.subr.bf16.mxu0 0
        %528 = vmatpush1.bf16.msra.mxu0 0
        %529 = vmatprep.subr.bf16.mxu0 0
        %530 = vmatpush1.bf16.msra.mxu0 0
        %531 = vmatprep.subr.bf16.mxu0 0
        %532 = vmatpush1.bf16.msra.mxu0 0
        %533 = vmatprep.subr.bf16.mxu0 0
        %534 = vmatpush1.bf16.msra.mxu0 0
        %535 = vmatprep.subr.bf16.mxu0 0
        %536 = vmatpush1.bf16.msra.mxu0 0
        %537 = vmatprep.subr.bf16.mxu0 0
        %538 = vmatpush1.bf16.msra.mxu0 0
        %539 = vmatprep.subr.bf16.mxu0 0
        %540 = vmatpush1.bf16.msra.mxu0 0
        %541 = vmatprep.subr.bf16.mxu0 0
        %542 = vmatpush1.bf16.msra.mxu0 0
        %543 = vmatprep.subr.bf16.mxu0 0
        %544 = vmatpush1.bf16.msra.mxu0 0
        %545 = vmatprep.subr.bf16.mxu0 0
        %546 = vmatpush1.bf16.msra.mxu0 0
        %547 = vmatprep.subr.bf16.mxu0 0
        %548 = vmatpush1.bf16.msra.mxu0 0
        %549 = vmatprep.subr.bf16.mxu0 0
        %550 = vmatpush1.bf16.msra.mxu0 0
        %551 = vmatprep.mubr.bf16.mxu0 0
        %552 = vmatmul.mubr.bf16.gmra.mrb[0].mxu0 %v517
        %v553 = vpop.f32.mrb[0].mxu0
        %v554 = vadd.f32 0.0, %v553
        %v555 = vpop.f32.mrb[0].mxu0
        %v556 = vpop.f32.mrb[0].mxu0
        %v557 = vadd.f32 0.0, %v556
        %v558 = vpop.f32.mrb[0].mxu0
        %559 = vdwg.mxu0
        %v560 = vadd.f32 %v487, %v554
        %v561 = vadd.f32 %v488, %v557
        %562 = vset.pattern.permute.xlu0 4
        %563 = vperm.xlu0 %562, %v269
        %v564 = vpop.permute.xlu0 %563
        %566 = vset.pattern.permute.xlu0 4
        %567 = vperm.xlu0 %566, %v270
        %v568 = vpop.permute.xlu0 %567
        %v570 = vmul.f32 %v267, %v564
        %v571 = vmul.f32 %v268, %v568
        %v572 = vpack.c.bf16 %v571, %v570
        %v573 = vld [vmem:[%s261 + $0x40] sm:$0xf]
        %v574 = vld [vmem:[%s261 + $0x44] sm:$0xf]
        %v575 = vld [vmem:[%s261 + $0x48] sm:$0xf]
        %v576 = vld [vmem:[%s261 + $0x4c] sm:$0xf]
        %v581 = vunpack.c.l.b16 %v573
        %v582 = vunpack.c.l.b16 %v574
        %v583 = vunpack.c.l.b16 %v575
        %v584 = vunpack.c.l.b16 %v576
        %v585 = vpack.c.b16 %v582, %v581
        %v586 = vpack.c.b16 %v584, %v583
        %v590 = vsel %vm315, %v572, 0
        %592 = vmatprep.subr.bf16.mxu0 0
        %593 = vmatpush1.bf16.msra.mxu0 %v585
        %594 = vmatprep.subr.bf16.mxu0 0
        %595 = vmatpush1.bf16.msra.mxu0 %v586
        %596 = vmatprep.subr.bf16.mxu0 0
        %597 = vmatpush1.bf16.msra.mxu0 0
        %598 = vmatprep.subr.bf16.mxu0 0
        %599 = vmatpush1.bf16.msra.mxu0 0
        %600 = vmatprep.subr.bf16.mxu0 0
        %601 = vmatpush1.bf16.msra.mxu0 0
        %602 = vmatprep.subr.bf16.mxu0 0
        %603 = vmatpush1.bf16.msra.mxu0 0
        %604 = vmatprep.subr.bf16.mxu0 0
        %605 = vmatpush1.bf16.msra.mxu0 0
        %606 = vmatprep.subr.bf16.mxu0 0
        %607 = vmatpush1.bf16.msra.mxu0 0
        %608 = vmatprep.subr.bf16.mxu0 0
        %609 = vmatpush1.bf16.msra.mxu0 0
        %610 = vmatprep.subr.bf16.mxu0 0
        %611 = vmatpush1.bf16.msra.mxu0 0
        %612 = vmatprep.subr.bf16.mxu0 0
        %613 = vmatpush1.bf16.msra.mxu0 0
        %614 = vmatprep.subr.bf16.mxu0 0
        %615 = vmatpush1.bf16.msra.mxu0 0
        %616 = vmatprep.subr.bf16.mxu0 0
        %617 = vmatpush1.bf16.msra.mxu0 0
        %618 = vmatprep.subr.bf16.mxu0 0
        %619 = vmatpush1.bf16.msra.mxu0 0
        %620 = vmatprep.subr.bf16.mxu0 0
        %621 = vmatpush1.bf16.msra.mxu0 0
        %622 = vmatprep.subr.bf16.mxu0 0
        %623 = vmatpush1.bf16.msra.mxu0 0
        %624 = vmatprep.mubr.bf16.mxu0 0
        %625 = vmatmul.mubr.bf16.gmra.mrb[0].mxu0 %v590
        %v626 = vpop.f32.mrb[0].mxu0
        %v627 = vadd.f32 0.0, %v626
        %v628 = vpop.f32.mrb[0].mxu0
        %v629 = vpop.f32.mrb[0].mxu0
        %v630 = vadd.f32 0.0, %v629
        %v631 = vpop.f32.mrb[0].mxu0
        %632 = vdwg.mxu0
        %v633 = vadd.f32 %v560, %v627
        %v634 = vadd.f32 %v561, %v630
        %v635 = vld [vmem:[%s264] sm:$0x1]
        %v637 = vlaneseq
        %v638 = vshrl.u32 %v637, 7
        %v639 = vsub.s32 0, %v638
        %v640 = vrot.slane %v635, %v639
        %v642 = vadd.f32 %v633, %v640
        %v643 = vadd.f32 %v634, %v640
        %644 = vst.msk [vmem:[%s245] sm:$0xff] %vm315, %v642
        %645 = vst.msk [vmem:[%s245 + $0x8] sm:$0xff] %vm315, %v643
        %s646 = sand.u32 %s144, 1
        %s647 = scalar_lea.sflag [#allocation3], %s646
        %s648 = sand.u32 %s144, 1
        %s649 = smul.addr %s648, 16
        %s650 = scalar_lea.vmem [#allocation2], %s649
        // Predicated region
        $region37: #{tpu_custom_call.1} parent=35 // pred_check
          %p651 = pneg %p154
        $region38: #{tpu_custom_call.1} parent=35 // pred_check_branch
          %653 = sbr.rel (%p651) target = $region40
        $region39: #{tpu_custom_call.1} parent=35 // pred_region
          %s654 = smul.u32 2, %s22
          %s656 = ssub.s32 256, 256
          %657 = vsyncadd %s647, %s656
          %s658 = sadd.s32 %s23, %s654
          %s659 = smul.addr %s658, 128
          %s660 = scalar_lea.hbm %s4, %s659
          %s661 = sshll.u32 %s650, 4
          %s662 = int_to_ptr.vmem [resolvable:$true] %s661
          %667 = dma.vmem_to_hbm [thread:$0]  %s662, 256, %s660, %s647, 128, 128, 8
        $region40: #{tpu_custom_call.1} parent=35 // pred_fallthru
          _
      $region36: #{tpu_custom_call.1} parent=5 // pred_fallthru
        _
      %p668 = scmp.le.s32.totalorder 2, %s13
      // Predicated region
      $region41: #{tpu_custom_call.1} parent=5 // pred_check
        %p669 = pneg %p668
      $region42: #{tpu_custom_call.1} parent=5 // pred_check_branch
        %671 = sbr.rel (%p669) target = $region44
      $region43: #{tpu_custom_call.1} parent=5 // pred_region
        %s672 = ssub.s32 %s13, 2
        // Predicated region
        $region45: #{tpu_custom_call.1} parent=43 // pred_check
          %p673 = pneg %p160
        $region46: #{tpu_custom_call.1} parent=43 // pred_check_branch
          %675 = sbr.rel (%p673) target = $region48
        $region47: #{tpu_custom_call.1} parent=43 // pred_region
          %s676 = sand.u32 %s145, 1
          %s677 = scalar_lea.sflag [#allocation3], %s676
          %s678 = sand.u32 %s145, 1
          %s679 = smul.addr %s678, 16
          %s680 = scalar_lea.vmem [#allocation2], %s679
          %681 = dma.done %s677, 256
        $region48: #{tpu_custom_call.1} parent=43 // pred_fallthru
          _
      $region44: #{tpu_custom_call.1} parent=5 // pred_fallthru
        _
    $region6: #{tpu_custom_call.1} parent=1 // loop_footer
      %s17 = sadd.s32 1, %s13
    $region7: #{tpu_custom_call.1} parent=1 // loop_footer_branch
      %12 = sbr.rel target = $region3
    $region8: #{tpu_custom_call.1} parent=1 // loop_exit
      _
    %682 = vsyncpa [#allocation3], 1
    %s683 = scalar_lea.sflag [#allocation3], 1
    %684 = vsyncpa %s683, 1

// kernel: tpu_custom_call.1
$region0: #{tpu_custom_call.1}
  #allocation0 [shape = 'u32[]', space=smem, size = 0x4, offset = 0x4, fixed_abs, tag = 'smem constant byte address 0x4 - core index']
  #allocation1 [shape = 'u32[144,128]{1,0:T(1,128)}', space=vmem, size = 0x12000, scoped, tag = 'internal scratch']
  %s0 = inlined_call_operand.vmem [shape: f32[32,32], index: 0, kind: input, shape index: {}]
  %s1 = inlined_call_operand.vmem [shape: f32[32,5], index: 1, kind: input, shape index: {}]
  %s2 = inlined_call_operand.vmem [shape: bf16[160,32], index: 2, kind: input, shape index: {}]
  %s3 = inlined_call_operand.vmem [shape: f32[1,32], index: 3, kind: input, shape index: {}]
  %s4 = inlined_call_operand.hbm [shape: f32[32,32], index: 4, kind: output, shape index: {}]
  %s5 = sld [smem:[#allocation0]]
  $region49: #{tpu_custom_call.1} parent=0
    _
  %s7 = ssub.s32 1, %s5
  %s8 = scalar_select 0, %s7, %s5
  $region1: #{tpu_custom_call.1} parent=0
    #allocation2 [shape = 'u8[16384]{0}', space=vmem, size = 0x4000, scoped, tag = 'output window, operand 0']
    #allocation3 [shape = 's32[2]{0}', space=sflag, size = 0x8, scoped, tag = 'scoped memory for tpu_custom_call.1']
    %9 = vsyncpa [#allocation3], 0
    %s10 = scalar_lea.sflag [#allocation3], 1
    %11 = vsyncpa %s10, 0
    loop: start=0, step=1, limit=4
    $region2: #{tpu_custom_call.1} parent=1 // loop_pre_header
      _
    $region3: #{tpu_custom_call.1} parent=1 // loop_header
      %s13 = sphi 0, %s17
      %p14 = scmp.ge.s32.totalorder %s13, 4
      %s20 = sphi 0, %s32
      %s21 = sphi 0, %s28
      %s22 = sphi 0, %s20
      %s23 = sphi 0, %s21
      %s24 = sphi 0, %s22
      %s25 = sphi 0, %s23
      %s35 = sphi 0, %s37
      %s38 = sphi 0, %s35
      %s39 = sphi 0, %s38
      %s55 = sphi 0, %s39
      %s61 = sphi 0, %s63
      %s64 = sphi 0, %s61
      %s65 = sphi 0, %s64
      %s81 = sphi 0, %s65
      %s87 = sphi 0, %s89
      %s90 = sphi 0, %s87
      %s91 = sphi 0, %s90
      %s107 = sphi 0, %s91
      %s113 = sphi 0, %s115
      %s116 = sphi 0, %s113
      %s117 = sphi 0, %s116
      %s133 = sphi 0, %s117
      %s141 = sphi 0, %s143
      %s144 = sphi 0, %s141
      %s145 = sphi 0, %s144
      %s161 = sphi 0, %s145
    $region4: #{tpu_custom_call.1} parent=1 // loop_header_branch
      %16 = sbr.rel (%p14) target = $region8
    $region5: #{tpu_custom_call.1} parent=1 // loop_body
      %s18 = ssub.s32 %s13, 1
      %s19 = ssub.s32 %s13, 2
      %s26 = sadd.s32 1, %s21
      %p27 = scmp.ge.s32.totalorder %s26, 1
      %s28 = scalar_select %p27, 0, %s26
      %s29 = sadd.s32 1, %s20
      %s30 = scalar_select %p27, %s29, %s20
      %p31 = scmp.ge.s32.totalorder %s30, 2
      %s32 = scalar_select %p31, 0, %s30
      %s33 = ssub.s32 %s20, %s32
      %p34 = scmp.eq.s32.totalorder %s33, 0
      %s36 = sadd.s32 %s35, 1
      %s37 = scalar_select %p34, %s35, %s36
      %p40 = pneg %p34
      %p41 = scmp.eq.s32.totalorder %s13, 1
      %p42 = por %p40, %p41
      %p43 = scmp.ne.s32.totalorder %s35, %s38
      %p44 = scmp.eq.s32.totalorder %s13, 0
      %p45 = por %p43, %p44
      %p46 = scmp.ne.s32.totalorder %s35, %s38
      %p47 = scmp.eq.s32.totalorder %s18, 1
      %p48 = por %p46, %p47
      %p49 = scmp.ne.s32.totalorder %s38, %s39
      %p50 = scmp.eq.s32.totalorder %s18, 0
      %p51 = por %p49, %p50
      %p52 = scmp.ne.s32.totalorder %s38, %s39
      %p53 = scmp.eq.s32.totalorder %s19, 1
      %p54 = por %p52, %p53
      %p56 = scmp.ne.s32.totalorder %s39, %s55
      %p57 = scmp.eq.s32.totalorder %s19, 0
      %p58 = por %p56, %p57
      %s59 = ssub.s32 %s20, %s32
      %p60 = scmp.eq.s32.totalorder %s59, 0
      %s62 = sadd.s32 %s61, 1
      %s63 = scalar_select %p60, %s61, %s62
      %p66 = pneg %p60
      %p67 = scmp.eq.s32.totalorder %s13, 1
      %p68 = por %p66, %p67
      %p69 = scmp.ne.s32.totalorder %s61, %s64
      %p70 = scmp.eq.s32.totalorder %s13, 0
      %p71 = por %p69, %p70
      %p72 = scmp.ne.s32.totalorder %s61, %s64
      %p73 = scmp.eq.s32.totalorder %s18, 1
      %p74 = por %p72, %p73
      %p75 = scmp.ne.s32.totalorder %s64, %s65
      %p76 = scmp.eq.s32.totalorder %s18, 0
      %p77 = por %p75, %p76
      %p78 = scmp.ne.s32.totalorder %s64, %s65
      %p79 = scmp.eq.s32.totalorder %s19, 1
      %p80 = por %p78, %p79
      %p82 = scmp.ne.s32.totalorder %s65, %s81
      %p83 = scmp.eq.s32.totalorder %s19, 0
      %p84 = por %p82, %p83
      %s85 = ssub.s32 %s21, %s28
      %p86 = scmp.eq.s32.totalorder %s85, 0
      %s88 = sadd.s32 %s87, 1
      %s89 = scalar_select %p86, %s87, %s88
      %p92 = pneg %p86
      %p93 = scmp.eq.s32.totalorder %s13, 1
      %p94 = por %p92, %p93
      %p95 = scmp.ne.s32.totalorder %s87, %s90
      %p96 = scmp.eq.s32.totalorder %s13, 0
      %p97 = por %p95, %p96
      %p98 = scmp.ne.s32.totalorder %s87, %s90
      %p99 = scmp.eq.s32.totalorder %s18, 1
      %p100 = por %p98, %p99
      %p101 = scmp.ne.s32.totalorder %s90, %s91
      %p102 = scmp.eq.s32.totalorder %s18, 0
      %p103 = por %p101, %p102
      %p104 = scmp.ne.s32.totalorder %s90, %s91
      %p105 = scmp.eq.s32.totalorder %s19, 1
      %p106 = por %p104, %p105
      %p108 = scmp.ne.s32.totalorder %s91, %s107
      %p109 = scmp.eq.s32.totalorder %s19, 0
      %p110 = por %p108, %p109
      %s111 = ssub.s32 %s21, %s28
      %p112 = scmp.eq.s32.totalorder %s111, 0
      %s114 = sadd.s32 %s113, 1
      %s115 = scalar_select %p112, %s113, %s114
      %p118 = pneg %p112
      %p119 = scmp.eq.s32.totalorder %s13, 1
      %p120 = por %p118, %p119
      %p121 = scmp.ne.s32.totalorder %s113, %s116
      %p122 = scmp.eq.s32.totalorder %s13, 0
      %p123 = por %p121, %p122
      %p124 = scmp.ne.s32.totalorder %s113, %s116
      %p125 = scmp.eq.s32.totalorder %s18, 1
      %p126 = por %p124, %p125
      %p127 = scmp.ne.s32.totalorder %s116, %s117
      %p128 = scmp.eq.s32.totalorder %s18, 0
      %p129 = por %p127, %p128
      %p130 = scmp.ne.s32.totalorder %s116, %s117
      %p131 = scmp.eq.s32.totalorder %s19, 1
      %p132 = por %p130, %p131
      %p134 = scmp.ne.s32.totalorder %s117, %s133
      %p135 = scmp.eq.s32.totalorder %s19, 0
      %p136 = por %p134, %p135
      %s137 = ssub.s32 %s20, %s32
      %s138 = ssub.s32 %s21, %s28
      %s139 = sor.u32 %s137, %s138
      %p140 = scmp.eq.s32.totalorder %s139, 0
      %s142 = sadd.s32 %s141, 1
      %s143 = scalar_select %p140, %s141, %s142
      %p146 = pneg %p140
      %p147 = scmp.eq.s32.totalorder %s13, 1
      %p148 = por %p146, %p147
      %p149 = scmp.ne.s32.totalorder %s141, %s144
      %p150 = scmp.eq.s32.totalorder %s13, 0
      %p151 = por %p149, %p150
      %p152 = scmp.ne.s32.totalorder %s141, %s144
      %p153 = scmp.eq.s32.totalorder %s18, 1
      %p154 = por %p152, %p153
      %p155 = scmp.ne.s32.totalorder %s144, %s145
      %p156 = scmp.eq.s32.totalorder %s18, 0
      %p157 = por %p155, %p156
      %p158 = scmp.ne.s32.totalorder %s144, %s145
      %p159 = scmp.eq.s32.totalorder %s19, 1
      %p160 = por %p158, %p159
      %p162 = scmp.ne.s32.totalorder %s145, %s161
      %p163 = scmp.eq.s32.totalorder %s19, 0
      %p164 = por %p162, %p163
      %p165 = scmp.le.s32.totalorder 1, %s13
      %p166 = scmp.lt.s32.totalorder %s13, 3
      %p167 = pnand %p165, %p166
      %p168 = pneg %p167
      // Predicated region
      $region9: #{tpu_custom_call.1} parent=5 // pred_check
        _
      $region10: #{tpu_custom_call.1} parent=5 // pred_check_branch
        %170 = sbr.rel (%p167) target = $region12
      $region11: #{tpu_custom_call.1} parent=5 // pred_region
        %s171 = ssub.s32 %s13, 1
        // Predicated region
        $region13: #{tpu_custom_call.1} parent=11 // pred_check
          %p172 = pneg %p103
        $region14: #{tpu_custom_call.1} parent=11 // pred_check_branch
          %174 = sbr.rel (%p172) target = $region16
        $region15: #{tpu_custom_call.1} parent=11 // pred_region
          %p175 = scmp.lt.s32.totalorder %s23, 0
          %s176 = scalar_select %p175, %s23, 0
          %s177 = smul.addr %s176, 4
          %s178 = scalar_lea.vmem %s2, %s177
        $region16: #{tpu_custom_call.1} parent=11 // pred_fallthru
          _
        // Predicated region
        $region17: #{tpu_custom_call.1} parent=11 // pred_check
          %p179 = pneg %p129
        $region18: #{tpu_custom_call.1} parent=11 // pred_check_branch
          %181 = sbr.rel (%p179) target = $region20
        $region19: #{tpu_custom_call.1} parent=11 // pred_region
          %p182 = scmp.lt.s32.totalorder %s23, 0
          %s183 = scalar_select %p182, %s23, 0
          %s184 = scalar_lea.vmem %s3, %s183
        $region20: #{tpu_custom_call.1} parent=11 // pred_fallthru
          _
      $region12: #{tpu_custom_call.1} parent=5 // pred_fallthru
        _
      %p185 = scmp.lt.s32.totalorder %s13, 2
      // Predicated region
      $region21: #{tpu_custom_call.1} parent=5 // pred_check
        %p186 = pneg %p185
      $region22: #{tpu_custom_call.1} parent=5 // pred_check_branch
        %188 = sbr.rel (%p186) target = $region24
      $region23: #{tpu_custom_call.1} parent=5 // pred_region
        // Predicated region
        $region25: #{tpu_custom_call.1} parent=23 // pred_check
          %p189 = pneg %p45
        $region26: #{tpu_custom_call.1} parent=23 // pred_check_branch
          %191 = sbr.rel (%p189) target = $region28
        $region27: #{tpu_custom_call.1} parent=23 // pred_region
          %s192 = smul.u32 2, %s20
          %p193 = scmp.lt.s32.totalorder %s192, 3
          %s194 = scalar_select %p193, %s192, 3
          %s195 = smul.addr %s194, 8
          %s196 = scalar_lea.vmem %s0, %s195
          %s197 = smul.u32 2, %s20
        $region28: #{tpu_custom_call.1} parent=23 // pred_fallthru
          _
        // Predicated region
        $region29: #{tpu_custom_call.1} parent=23 // pred_check
          %p198 = pneg %p71
        $region30: #{tpu_custom_call.1} parent=23 // pred_check_branch
          %200 = sbr.rel (%p198) target = $region32
        $region31: #{tpu_custom_call.1} parent=23 // pred_region
          %s201 = smul.u32 2, %s20
          %p202 = scmp.lt.s32.totalorder %s201, 3
          %s203 = scalar_select %p202, %s201, 3
          %s204 = smul.addr %s203, 8
          %s205 = scalar_lea.vmem %s1, %s204
          %s206 = smul.u32 2, %s20
        $region32: #{tpu_custom_call.1} parent=23 // pred_fallthru
          _
      $region24: #{tpu_custom_call.1} parent=5 // pred_fallthru
        _
      %p207 = scmp.le.s32.totalorder 1, %s13
      %p208 = scmp.lt.s32.totalorder %s13, 3
      %p209 = pnand %p207, %p208
      %p210 = pneg %p209
      // Predicated region
      $region33: #{tpu_custom_call.1} parent=5 // pred_check
        _
      $region34: #{tpu_custom_call.1} parent=5 // pred_check_branch
        %212 = sbr.rel (%p209) target = $region36
      $region35: #{tpu_custom_call.1} parent=5 // pred_region
        %s213 = ssub.s32 %s13, 1
        %s214 = smul.u32 2, %s22
        %p215 = scmp.lt.s32.totalorder %s214, 3
        %s216 = scalar_select %p215, %s214, 3
        %s217 = smul.addr %s216, 8
        %s218 = scalar_lea.vmem %s0, %s217
        %p219 = pneg %p51
        %p220 = pneg %p48
        %s221 = smul.u32 2, %s22
        %p222 = scmp.lt.s32.totalorder %s221, 3
        %s223 = scalar_select %p222, %s221, 3
        %s224 = smul.addr %s223, 8
        %s225 = scalar_lea.vmem %s1, %s224
        %p226 = pneg %p77
        %p227 = pneg %p74
        %p228 = scmp.lt.s32.totalorder %s23, 0
        %s229 = scalar_select %p228, %s23, 0
        %s230 = smul.addr %s229, 4
        %s231 = scalar_lea.vmem %s2, %s230
        %p232 = pneg %p103
        %p233 = pneg %p100
        %p234 = scmp.lt.s32.totalorder %s23, 0
        %s235 = scalar_select %p234, %s23, 0
        %s236 = scalar_lea.vmem %s3, %s235
        %p237 = pneg %p129
        %p238 = pneg %p126
        %p239 = pneg %p157
        %p240 = pneg %p154
        %s241 = sand.u32 %s144, 1
        %s242 = scalar_lea.sflag [#allocation3], %s241
        %s243 = sand.u32 %s144, 1
        %s244 = smul.addr %s243, 16
        %s245 = scalar_lea.vmem [#allocation2], %s244
        %s246 = smul.u32 2, %s22
        %p247 = scmp.lt.s32.totalorder %s246, 3
        %s248 = scalar_select %p247, %s246, 3
        %s249 = smul.addr %s248, 8
        %s250 = scalar_lea.vmem %s0, %s249
        %s251 = smul.u32 2, %s22
        %s252 = smul.u32 2, %s22
        %p253 = scmp.lt.s32.totalorder %s252, 3
        %s254 = scalar_select %p253, %s252, 3
        %s255 = smul.addr %s254, 8
        %s256 = scalar_lea.vmem %s1, %s255
        %s257 = smul.u32 2, %s22
        %p258 = scmp.lt.s32.totalorder %s23, 0
        %s259 = scalar_select %p258, %s23, 0
        %s260 = smul.addr %s259, 4
        %s261 = scalar_lea.vmem %s2, %s260
        %p262 = scmp.lt.s32.totalorder %s23, 0
        %s263 = scalar_select %p262, %s23, 0
        %s264 = scalar_lea.vmem %s3, %s263
        %s265 = smul.u32 2, %s22
        %v267 = vld [vmem:[%s250] sm:$0xff]
        %v268 = vld [vmem:[%s250 + $0x8] sm:$0xff]
        %v269 = vld [vmem:[%s256] sm:$0xff]
        %v270 = vld [vmem:[%s256 + $0x8] sm:$0xff]
        %272 = vset.pattern.permute.xlu0 0
        %273 = vperm.xlu0 %272, %v269
        %v274 = vpop.permute.xlu0 %273
        %277 = vset.pattern.permute.xlu0 0
        %278 = vperm.xlu0 %277, %v270
        %v279 = vpop.permute.xlu0 %278
        %v281 = vmul.f32 %v267, %v274
        %v282 = vmul.f32 %v268, %v279
        %v283 = vpack.c.bf16 %v282, %v281
        %v284 = vld [vmem:[%s261] sm:$0xf]
        %v285 = vld [vmem:[%s261 + $0x4] sm:$0xf]
        %v286 = vld [vmem:[%s261 + $0x8] sm:$0xf]
        %v287 = vld [vmem:[%s261 + $0xc] sm:$0xf]
        %288 = vset.pattern.permute.xlu0 1
        %289 = vperm.xlu0 %288, %v269
        %v290 = vpop.permute.xlu0 %289
        %292 = vset.pattern.permute.xlu0 1
        %293 = vperm.xlu0 %292, %v270
        %v294 = vpop.permute.xlu0 %293
        %v296 = vmul.f32 %v267, %v290
        %v297 = vmul.f32 %v268, %v294
        %v298 = vpack.c.bf16 %v297, %v296
        %v299 = vld [vmem:[%s261 + $0x10] sm:$0xf]
        %v300 = vld [vmem:[%s261 + $0x14] sm:$0xf]
        %v301 = vld [vmem:[%s261 + $0x18] sm:$0xf]
        %v302 = vld [vmem:[%s261 + $0x1c] sm:$0xf]
        %v307 = vunpack.c.l.b16 %v299
        %v308 = vunpack.c.l.b16 %v300
        %v309 = vunpack.c.l.b16 %v301
        %v310 = vunpack.c.l.b16 %v302
        %v311 = vpack.c.b16 %v308, %v307
        %v312 = vpack.c.b16 %v310, %v309
        %vm315 = vcmask 261120
        %v317 = vsel %vm315, %v298, 0
        %319 = vmatprep.subr.bf16.mxu0 0
        %320 = vmatpush1.bf16.msra.mxu0 %v311
        %321 = vmatprep.subr.bf16.mxu0 0
        %322 = vmatpush1.bf16.msra.mxu0 %v312
        %323 = vmatprep.subr.bf16.mxu0 0
        %324 = vmatpush1.bf16.msra.mxu0 0
        %325 = vmatprep.subr.bf16.mxu0 0
        %326 = vmatpush1.bf16.msra.mxu0 0
        %327 = vmatprep.subr.bf16.mxu0 0
        %328 = vmatpush1.bf16.msra.mxu0 0
        %329 = vmatprep.subr.bf16.mxu0 0
        %330 = vmatpush1.bf16.msra.mxu0 0
        %331 = vmatprep.subr.bf16.mxu0 0
        %332 = vmatpush1.bf16.msra.mxu0 0
        %333 = vmatprep.subr.bf16.mxu0 0
        %334 = vmatpush1.bf16.msra.mxu0 0
        %335 = vmatprep.subr.bf16.mxu0 0
        %336 = vmatpush1.bf16.msra.mxu0 0
        %337 = vmatprep.subr.bf16.mxu0 0
        %338 = vmatpush1.bf16.msra.mxu0 0
        %339 = vmatprep.subr.bf16.mxu0 0
        %340 = vmatpush1.bf16.msra.mxu0 0
        %341 = vmatprep.subr.bf16.mxu0 0
        %342 = vmatpush1.bf16.msra.mxu0 0
        %343 = vmatprep.subr.bf16.mxu0 0
        %344 = vmatpush1.bf16.msra.mxu0 0
        %345 = vmatprep.subr.bf16.mxu0 0
        %346 = vmatpush1.bf16.msra.mxu0 0
        %347 = vmatprep.subr.bf16.mxu0 0
        %348 = vmatpush1.bf16.msra.mxu0 0
        %349 = vmatprep.subr.bf16.mxu0 0
        %350 = vmatpush1.bf16.msra.mxu0 0
        %351 = vmatprep.mubr.bf16.mxu0 0
        %352 = vmatmul.mubr.bf16.gmra.mrb[0].mxu0 %v317
        %v353 = vpop.f32.mrb[0].mxu0
        %v354 = vadd.f32 0.0, %v353
        %v355 = vpop.f32.mrb[0].mxu0
        %v356 = vpop.f32.mrb[0].mxu0
        %v357 = vadd.f32 0.0, %v356
        %v358 = vpop.f32.mrb[0].mxu0
        %359 = vdwg.mxu0
        %v364 = vunpack.c.l.b16 %v284
        %v365 = vunpack.c.l.b16 %v285
        %v366 = vunpack.c.l.b16 %v286
        %v367 = vunpack.c.l.b16 %v287
        %v368 = vpack.c.b16 %v365, %v364
        %v369 = vpack.c.b16 %v367, %v366
        %v373 = vsel %vm315, %v283, 0
        %375 = vmatprep.subr.bf16.mxu0 0
        %376 = vmatpush1.bf16.msra.mxu0 %v368
        %377 = vmatprep.subr.bf16.mxu0 0
        %378 = vmatpush1.bf16.msra.mxu0 %v369
        %379 = vmatprep.subr.bf16.mxu0 0
        %380 = vmatpush1.bf16.msra.mxu0 0
        %381 = vmatprep.subr.bf16.mxu0 0
        %382 = vmatpush1.bf16.msra.mxu0 0
        %383 = vmatprep.subr.bf16.mxu0 0
        %384 = vmatpush1.bf16.msra.mxu0 0
        %385 = vmatprep.subr.bf16.mxu0 0
        %386 = vmatpush1.bf16.msra.mxu0 0
        %387 = vmatprep.subr.bf16.mxu0 0
        %388 = vmatpush1.bf16.msra.mxu0 0
        %389 = vmatprep.subr.bf16.mxu0 0
        %390 = vmatpush1.bf16.msra.mxu0 0
        %391 = vmatprep.subr.bf16.mxu0 0
        %392 = vmatpush1.bf16.msra.mxu0 0
        %393 = vmatprep.subr.bf16.mxu0 0
        %394 = vmatpush1.bf16.msra.mxu0 0
        %395 = vmatprep.subr.bf16.mxu0 0
        %396 = vmatpush1.bf16.msra.mxu0 0
        %397 = vmatprep.subr.bf16.mxu0 0
        %398 = vmatpush1.bf16.msra.mxu0 0
        %399 = vmatprep.subr.bf16.mxu0 0
        %400 = vmatpush1.bf16.msra.mxu0 0
        %401 = vmatprep.subr.bf16.mxu0 0
        %402 = vmatpush1.bf16.msra.mxu0 0
        %403 = vmatprep.subr.bf16.mxu0 0
        %404 = vmatpush1.bf16.msra.mxu0 0
        %405 = vmatprep.subr.bf16.mxu0 0
        %406 = vmatpush1.bf16.msra.mxu0 0
        %407 = vmatprep.mubr.bf16.mxu0 0
        %408 = vmatmul.mubr.bf16.gmra.mrb[0].mxu0 %v373
        %v409 = vpop.f32.mrb[0].mxu0
        %v410 = vadd.f32 %v354, %v409
        %v411 = vpop.f32.mrb[0].mxu0
        %v412 = vpop.f32.mrb[0].mxu0
        %v413 = vadd.f32 %v357, %v412
        %v414 = vpop.f32.mrb[0].mxu0
        %415 = vdwg.mxu0
        %416 = vset.pattern.permute.xlu0 2
        %417 = vperm.xlu0 %416, %v269
        %v418 = vpop.permute.xlu0 %417
        %420 = vset.pattern.permute.xlu0 2
        %421 = vperm.xlu0 %420, %v270
        %v422 = vpop.permute.xlu0 %421
        %v424 = vmul.f32 %v267, %v418
        %v425 = vmul.f32 %v268, %v422
        %v426 = vpack.c.bf16 %v425, %v424
        %v427 = vld [vmem:[%s261 + $0x20] sm:$0xf]
        %v428 = vld [vmem:[%s261 + $0x24] sm:$0xf]
        %v429 = vld [vmem:[%s261 + $0x28] sm:$0xf]
        %v430 = vld [vmem:[%s261 + $0x2c] sm:$0xf]
        %v435 = vunpack.c.l.b16 %v427
        %v436 = vunpack.c.l.b16 %v428
        %v437 = vunpack.c.l.b16 %v429
        %v438 = vunpack.c.l.b16 %v430
        %v439 = vpack.c.b16 %v436, %v435
        %v440 = vpack.c.b16 %v438, %v437
        %v444 = vsel %vm315, %v426, 0
        %446 = vmatprep.subr.bf16.mxu0 0
        %447 = vmatpush1.bf16.msra.mxu0 %v439
        %448 = vmatprep.subr.bf16.mxu0 0
        %449 = vmatpush1.bf16.msra.mxu0 %v440
        %450 = vmatprep.subr.bf16.mxu0 0
        %451 = vmatpush1.bf16.msra.mxu0 0
        %452 = vmatprep.subr.bf16.mxu0 0
        %453 = vmatpush1.bf16.msra.mxu0 0
        %454 = vmatprep.subr.bf16.mxu0 0
        %455 = vmatpush1.bf16.msra.mxu0 0
        %456 = vmatprep.subr.bf16.mxu0 0
        %457 = vmatpush1.bf16.msra.mxu0 0
        %458 = vmatprep.subr.bf16.mxu0 0
        %459 = vmatpush1.bf16.msra.mxu0 0
        %460 = vmatprep.subr.bf16.mxu0 0
        %461 = vmatpush1.bf16.msra.mxu0 0
        %462 = vmatprep.subr.bf16.mxu0 0
        %463 = vmatpush1.bf16.msra.mxu0 0
        %464 = vmatprep.subr.bf16.mxu0 0
        %465 = vmatpush1.bf16.msra.mxu0 0
        %466 = vmatprep.subr.bf16.mxu0 0
        %467 = vmatpush1.bf16.msra.mxu0 0
        %468 = vmatprep.subr.bf16.mxu0 0
        %469 = vmatpush1.bf16.msra.mxu0 0
        %470 = vmatprep.subr.bf16.mxu0 0
        %471 = vmatpush1.bf16.msra.mxu0 0
        %472 = vmatprep.subr.bf16.mxu0 0
        %473 = vmatpush1.bf16.msra.mxu0 0
        %474 = vmatprep.subr.bf16.mxu0 0
        %475 = vmatpush1.bf16.msra.mxu0 0
        %476 = vmatprep.subr.bf16.mxu0 0
        %477 = vmatpush1.bf16.msra.mxu0 0
        %478 = vmatprep.mubr.bf16.mxu0 0
        %479 = vmatmul.mubr.bf16.gmra.mrb[0].mxu0 %v444
        %v480 = vpop.f32.mrb[0].mxu0
        %v481 = vadd.f32 0.0, %v480
        %v482 = vpop.f32.mrb[0].mxu0
        %v483 = vpop.f32.mrb[0].mxu0
        %v484 = vadd.f32 0.0, %v483
        %v485 = vpop.f32.mrb[0].mxu0
        %486 = vdwg.mxu0
        %v487 = vadd.f32 %v410, %v481
        %v488 = vadd.f32 %v413, %v484
        %489 = vset.pattern.permute.xlu0 3
        %490 = vperm.xlu0 %489, %v269
        %v491 = vpop.permute.xlu0 %490
        %493 = vset.pattern.permute.xlu0 3
        %494 = vperm.xlu0 %493, %v270
        %v495 = vpop.permute.xlu0 %494
        %v497 = vmul.f32 %v267, %v491
        %v498 = vmul.f32 %v268, %v495
        %v499 = vpack.c.bf16 %v498, %v497
        %v500 = vld [vmem:[%s261 + $0x30] sm:$0xf]
        %v501 = vld [vmem:[%s261 + $0x34] sm:$0xf]
        %v502 = vld [vmem:[%s261 + $0x38] sm:$0xf]
        %v503 = vld [vmem:[%s261 + $0x3c] sm:$0xf]
        %v508 = vunpack.c.l.b16 %v500
        %v509 = vunpack.c.l.b16 %v501
        %v510 = vunpack.c.l.b16 %v502
        %v511 = vunpack.c.l.b16 %v503
        %v512 = vpack.c.b16 %v509, %v508
        %v513 = vpack.c.b16 %v511, %v510
        %v517 = vsel %vm315, %v499, 0
        %519 = vmatprep.subr.bf16.mxu0 0
        %520 = vmatpush1.bf16.msra.mxu0 %v512
        %521 = vmatprep.subr.bf16.mxu0 0
        %522 = vmatpush1.bf16.msra.mxu0 %v513
        %523 = vmatprep.subr.bf16.mxu0 0
        %524 = vmatpush1.bf16.msra.mxu0 0
        %525 = vmatprep.subr.bf16.mxu0 0
        %526 = vmatpush1.bf16.msra.mxu0 0
        %527 = vmatprep.subr.bf16.mxu0 0
        %528 = vmatpush1.bf16.msra.mxu0 0
        %529 = vmatprep.subr.bf16.mxu0 0
        %530 = vmatpush1.bf16.msra.mxu0 0
        %531 = vmatprep.subr.bf16.mxu0 0
        %532 = vmatpush1.bf16.msra.mxu0 0
        %533 = vmatprep.subr.bf16.mxu0 0
        %534 = vmatpush1.bf16.msra.mxu0 0
        %535 = vmatprep.subr.bf16.mxu0 0
        %536 = vmatpush1.bf16.msra.mxu0 0
        %537 = vmatprep.subr.bf16.mxu0 0
        %538 = vmatpush1.bf16.msra.mxu0 0
        %539 = vmatprep.subr.bf16.mxu0 0
        %540 = vmatpush1.bf16.msra.mxu0 0
        %541 = vmatprep.subr.bf16.mxu0 0
        %542 = vmatpush1.bf16.msra.mxu0 0
        %543 = vmatprep.subr.bf16.mxu0 0
        %544 = vmatpush1.bf16.msra.mxu0 0
        %545 = vmatprep.subr.bf16.mxu0 0
        %546 = vmatpush1.bf16.msra.mxu0 0
        %547 = vmatprep.subr.bf16.mxu0 0
        %548 = vmatpush1.bf16.msra.mxu0 0
        %549 = vmatprep.subr.bf16.mxu0 0
        %550 = vmatpush1.bf16.msra.mxu0 0
        %551 = vmatprep.mubr.bf16.mxu0 0
        %552 = vmatmul.mubr.bf16.gmra.mrb[0].mxu0 %v517
        %v553 = vpop.f32.mrb[0].mxu0
        %v554 = vadd.f32 0.0, %v553
        %v555 = vpop.f32.mrb[0].mxu0
        %v556 = vpop.f32.mrb[0].mxu0
        %v557 = vadd.f32 0.0, %v556
        %v558 = vpop.f32.mrb[0].mxu0
        %559 = vdwg.mxu0
        %v560 = vadd.f32 %v487, %v554
        %v561 = vadd.f32 %v488, %v557
        %562 = vset.pattern.permute.xlu0 4
        %563 = vperm.xlu0 %562, %v269
        %v564 = vpop.permute.xlu0 %563
        %566 = vset.pattern.permute.xlu0 4
        %567 = vperm.xlu0 %566, %v270
        %v568 = vpop.permute.xlu0 %567
        %v570 = vmul.f32 %v267, %v564
        %v571 = vmul.f32 %v268, %v568
        %v572 = vpack.c.bf16 %v571, %v570
        %v573 = vld [vmem:[%s261 + $0x40] sm:$0xf]
        %v574 = vld [vmem:[%s261 + $0x44] sm:$0xf]
        %v575 = vld [vmem:[%s261 + $0x48] sm:$0xf]
        %v576 = vld [vmem:[%s261 + $0x4c] sm:$0xf]
        %v581 = vunpack.c.l.b16 %v573
        %v582 = vunpack.c.l.b16 %v574
        %v583 = vunpack.c.l.b16 %v575
        %v584 = vunpack.c.l.b16 %v576
        %v585 = vpack.c.b16 %v582, %v581
        %v586 = vpack.c.b16 %v584, %v583
        %v590 = vsel %vm315, %v572, 0
        %592 = vmatprep.subr.bf16.mxu0 0
        %593 = vmatpush1.bf16.msra.mxu0 %v585
        %594 = vmatprep.subr.bf16.mxu0 0
        %595 = vmatpush1.bf16.msra.mxu0 %v586
        %596 = vmatprep.subr.bf16.mxu0 0
        %597 = vmatpush1.bf16.msra.mxu0 0
        %598 = vmatprep.subr.bf16.mxu0 0
        %599 = vmatpush1.bf16.msra.mxu0 0
        %600 = vmatprep.subr.bf16.mxu0 0
        %601 = vmatpush1.bf16.msra.mxu0 0
        %602 = vmatprep.subr.bf16.mxu0 0
        %603 = vmatpush1.bf16.msra.mxu0 0
        %604 = vmatprep.subr.bf16.mxu0 0
        %605 = vmatpush1.bf16.msra.mxu0 0
        %606 = vmatprep.subr.bf16.mxu0 0
        %607 = vmatpush1.bf16.msra.mxu0 0
        %608 = vmatprep.subr.bf16.mxu0 0
        %609 = vmatpush1.bf16.msra.mxu0 0
        %610 = vmatprep.subr.bf16.mxu0 0
        %611 = vmatpush1.bf16.msra.mxu0 0
        %612 = vmatprep.subr.bf16.mxu0 0
        %613 = vmatpush1.bf16.msra.mxu0 0
        %614 = vmatprep.subr.bf16.mxu0 0
        %615 = vmatpush1.bf16.msra.mxu0 0
        %616 = vmatprep.subr.bf16.mxu0 0
        %617 = vmatpush1.bf16.msra.mxu0 0
        %618 = vmatprep.subr.bf16.mxu0 0
        %619 = vmatpush1.bf16.msra.mxu0 0
        %620 = vmatprep.subr.bf16.mxu0 0
        %621 = vmatpush1.bf16.msra.mxu0 0
        %622 = vmatprep.subr.bf16.mxu0 0
        %623 = vmatpush1.bf16.msra.mxu0 0
        %624 = vmatprep.mubr.bf16.mxu0 0
        %625 = vmatmul.mubr.bf16.gmra.mrb[0].mxu0 %v590
        %v626 = vpop.f32.mrb[0].mxu0
        %v627 = vadd.f32 0.0, %v626
        %v628 = vpop.f32.mrb[0].mxu0
        %v629 = vpop.f32.mrb[0].mxu0
        %v630 = vadd.f32 0.0, %v629
        %v631 = vpop.f32.mrb[0].mxu0
        %632 = vdwg.mxu0
        %v633 = vadd.f32 %v560, %v627
        %v634 = vadd.f32 %v561, %v630
        %v635 = vld [vmem:[%s264] sm:$0x1]
        %v637 = vlaneseq
        %v638 = vshrl.u32 %v637, 7
        %v639 = vsub.s32 0, %v638
        %v640 = vrot.slane %v635, %v639
        %v642 = vadd.f32 %v633, %v640
        %v643 = vadd.f32 %v634, %v640
        %644 = vst.msk [vmem:[%s245] sm:$0xff] %vm315, %v642
        %645 = vst.msk [vmem:[%s245 + $0x8] sm:$0xff] %vm315, %v643
        %s646 = sand.u32 %s144, 1
        %s647 = scalar_lea.sflag [#allocation3], %s646
        %s648 = sand.u32 %s144, 1
        %s649 = smul.addr %s648, 16
        %s650 = scalar_lea.vmem [#allocation2], %s649
        // Predicated region
        $region37: #{tpu_custom_call.1} parent=35 // pred_check
          %p651 = pneg %p154
        $region38: #{tpu_custom_call.1} parent=35 // pred_check_branch
          %653 = sbr.rel (%p651) target = $region40
        $region39: #{tpu_custom_call.1} parent=35 // pred_region
          %s654 = smul.u32 2, %s22
          %s656 = ssub.s32 256, 256
          %657 = vsyncadd %s647, %s656
          %s658 = sadd.s32 %s23, %s654
          %s659 = smul.addr %s658, 128
          %s660 = scalar_lea.hbm %s4, %s659
          %s661 = sshll.u32 %s650, 4
          %s662 = int_to_ptr.vmem [resolvable:$true] %s661
          %667 = dma.vmem_to_hbm [thread:$0]  %s662, 256, %s660, %s647, 128, 128, 8
        $region40: #{tpu_custom_call.1} parent=35 // pred_fallthru
          _
      $region36: #{tpu_custom_call.1} parent=5 // pred_fallthru
        _
      %p668 = scmp.le.s32.totalorder 2, %s13
      // Predicated region
      $region41: #{tpu_custom_call.1} parent=5 // pred_check
        %p669 = pneg %p668
      $region42: #{tpu_custom_call.1} parent=5 // pred_check_branch
        %671 = sbr.rel (%p669) target = $region44
      $region43: #{tpu_custom_call.1} parent=5 // pred_region
        %s672 = ssub.s32 %s13, 2
        // Predicated region
        $region45: #{tpu_custom_call.1} parent=43 // pred_check
          %p673 = pneg %p160
        $region46: #{tpu_custom_call.1} parent=43 // pred_check_branch
          %675 = sbr.rel (%p673) target = $region48
        $region47: #{tpu_custom_call.1} parent=43 // pred_region
          %s676 = sand.u32 %s145, 1
          %s677 = scalar_lea.sflag [#allocation3], %s676
          %s678 = sand.u32 %s145, 1
          %s679 = smul.addr %s678, 16
          %s680 = scalar_lea.vmem [#allocation2], %s679
          %681 = dma.done %s677, 256
        $region48: #{tpu_custom_call.1} parent=43 // pred_fallthru
          _
      $region44: #{tpu_custom_call.1} parent=5 // pred_fallthru
        _
    $region6: #{tpu_custom_call.1} parent=1 // loop_footer
      %s17 = sadd.s32 1, %s13
    $region7: #{tpu_custom_call.1} parent=1 // loop_footer_branch
      %12 = sbr.rel target = $region3
    $region8: #{tpu_custom_call.1} parent=1 // loop_exit
      _
    %682 = vsyncpa [#allocation3], 1
    %s683 = scalar_lea.sflag [#allocation3], 1
    %684 = vsyncpa %s683, 1

</llo_original>
